<compile_context>
chip_gen: v7x
topology: tpu7x:2x2x1
jax: 0.10.0
libtpu: 0.0.40
codegen_flags: <defaults>
</compile_context>

<pallas_src>
import functools

import jax
import jax.numpy as jnp
from jax import lax
from jax.experimental import pallas as pl
from jax.experimental.pallas import tpu as pltpu


def _round_up(x, m):
    return ((x + m - 1) // m) * m


# ----------------------------------------------------------------------------
# Kernel: one (batch-block, time-chunk) grid step of the full recurrence + FC.
# ----------------------------------------------------------------------------
def _fused_rnn_kernel(*refs, num_layers, chunk_len, block_b, hidden, compute_dtype):
    """refs = (proj0, whh0_t, [w_ih_t, w_hh_t, bias] * (L-1), wfc_t, bfc, out, h_scr)."""
    idx = 0
    proj_ref = refs[idx]; idx += 1           # (Tc, block_b, Hp)  compute dtype
    whh0_ref = refs[idx]; idx += 1           # (Hp, Hp)           layer-0 W_hh^T
    wih_refs, whh_refs, bias_refs = [], [], []
    for _ in range(num_layers - 1):
        wih_refs.append(refs[idx]); idx += 1   # (Hp, Hp)  W_ih^T
        whh_refs.append(refs[idx]); idx += 1   # (Hp, Hp)  W_hh^T
        bias_refs.append(refs[idx]); idx += 1  # (1, Hp)   b_ih + b_hh (f32)
    wfc_ref = refs[idx]; idx += 1            # (Hp, Op)
    bfc_ref = refs[idx]; idx += 1            # (1, Op)
    out_ref = refs[idx]; idx += 1            # (block_b, Op)  output (resident across t)
    h_ref = refs[idx]                        # (L, block_b, Hp) f32 scratch, persists

    t_chunk = pl.program_id(1)

    @pl.when(t_chunk == 0)
    def _():
        h_ref[...] = jnp.zeros_like(h_ref)

    # Weights loaded once per chunk; reused for all chunk_len serial steps.
    whh0 = whh0_ref[...]
    wihs = [r[...] for r in wih_refs]
    whhs = [r[...] for r in whh_refs]
    # Hoist bias broadcasts out of the serial loop (JAX does not CSE broadcast_in_dim).
    biases = [jnp.broadcast_to(r[...], (block_b, hidden)) for r in bias_refs]

    # Hidden states carried as loop values (vregs) within the chunk.
    hs0 = tuple(h_ref[l] for l in range(num_layers))

    def step(i, hs):
        # Layer 0: input projection + bias were hoisted out of the serial region,
        # only the recurrent matmul sits on the latency-critical chain.
        pre0 = proj_ref[i].astype(jnp.float32) + jnp.dot(
            hs[0].astype(compute_dtype), whh0, preferred_element_type=jnp.float32)
        new_hs = [jnp.tanh(pre0)]
        # Layers >= 1: two MXU pushes with shared f32 accumulation (no per-step concat).
        for l in range(1, num_layers):
            pre = (jnp.dot(new_hs[l - 1].astype(compute_dtype), wihs[l - 1],
                           preferred_element_type=jnp.float32)
                   + jnp.dot(hs[l].astype(compute_dtype), whhs[l - 1],
                             preferred_element_type=jnp.float32)
                   + biases[l - 1])
            new_hs.append(jnp.tanh(pre))
        return tuple(new_hs)

    hs = lax.fori_loop(0, chunk_len, step, hs0, unroll=min(chunk_len, 8))

    # Persist hidden state for the next time chunk.
    for l in range(num_layers):
        h_ref[l] = hs[l]

    # output[:, -1, :] -> dropout (identity in eval) -> fc, fused at the last chunk.
    # TODO(synk): nn.Dropout is identity in eval mode; training-mode mask not applied.
    @pl.when(t_chunk == pl.num_programs(1) - 1)
    def _():
        out = jnp.dot(hs[num_layers - 1].astype(compute_dtype), wfc_ref[...],
                      preferred_element_type=jnp.float32) + bfc_ref[...]
        out_ref[...] = out.astype(out_ref.dtype)


# ----------------------------------------------------------------------------
# Wrapper
# ----------------------------------------------------------------------------
@functools.partial(jax.jit, static_argnames=("compute_dtype",))
def rnn_forward(x_btd, params, compute_dtype=jnp.bfloat16):
    """Full forward of the PyTorch RNN module (eval mode).

    x_btd: (B, T, input_size), batch_first like PyTorch. Returns (B, output_size) f32.
    """
    B, T, _ = x_btd.shape
    layers = params["rnn"]
    L = len(layers)
    H = layers[0]["w_hh"].shape[0]
    O = params["fc_w"].shape[0]
    cdt = compute_dtype

    # ----- lane/sublane padding (zeros preserve exact semantics) -----
    Bp = _round_up(B, 8)          # sublane
    Hp = _round_up(H, 128)        # lane
    Op = _round_up(O, 128)        # lane

    x_p = jnp.pad(x_btd, ((0, Bp - B), (0, 0), (0, 0)))

    # ----- hoisted, fully-parallel layer-0 input projection (bf16 MXU, f32 accum) -----
    l0 = layers[0]
    w_ih0_p = jnp.pad(l0["w_ih"], ((0, Hp - H), (0, 0)))
    b0_p = jnp.pad(l0["b_ih"] + l0["b_hh"], (0, Hp - H)).astype(jnp.float32)
    proj0 = jnp.einsum("btd,hd->tbh", x_p.astype(cdt), w_ih0_p.astype(cdt),
                       preferred_element_type=jnp.float32)
    proj0 = (proj0 + b0_p).astype(cdt)                       # (T, Bp, Hp), compute dtype

    whh0_t = jnp.pad(l0["w_hh"], ((0, Hp - H), (0, Hp - H))).T.astype(cdt)

    operands = [proj0, whh0_t]
    for l in range(1, L):
        lay = layers[l]
        wih_t = jnp.pad(lay["w_ih"], ((0, Hp - H), (0, Hp - H))).T.astype(cdt)
        whh_t = jnp.pad(lay["w_hh"], ((0, Hp - H), (0, Hp - H))).T.astype(cdt)
        bias = jnp.pad(lay["b_ih"] + lay["b_hh"], (0, Hp - H)).reshape(1, Hp)
        operands += [wih_t, whh_t, bias.astype(jnp.float32)]
    wfc_t = jnp.pad(params["fc_w"], ((0, Op - O), (0, Hp - H))).T.astype(cdt)
    bfc = jnp.pad(params["fc_b"], (0, Op - O)).reshape(1, Op).astype(jnp.float32)
    operands += [wfc_t, bfc]

    # ----- grid: (batch blocks [parallel, v7x megacore], time chunks [arbitrary]) -----
    nb = 2 if (Bp >= 16 and Bp % 16 == 0) else 1
    block_b = Bp // nb

    itemsize = jnp.dtype(cdt).itemsize
    # Keep the double-buffered proj0 chunk well under the VMEM budget (~8 MiB/buffer).
    max_tc_vmem = max(1, (8 * 1024 * 1024) // (block_b * Hp * itemsize))
    tc_target = max(1, min(T, 128, max_tc_vmem))
    tc = max(d for d in range(1, tc_target + 1) if T % d == 0)   # divisor of T
    nt = T // tc

    in_specs = [pl.BlockSpec((tc, block_b, Hp), lambda b, t: (t, b, 0)),   # proj0
                pl.BlockSpec((Hp, Hp), lambda b, t: (0, 0))]               # whh0_t
    for _ in range(L - 1):
        in_specs += [pl.BlockSpec((Hp, Hp), lambda b, t: (0, 0)),
                     pl.BlockSpec((Hp, Hp), lambda b, t: (0, 0)),
                     pl.BlockSpec((1, Hp), lambda b, t: (0, 0))]
    in_specs += [pl.BlockSpec((Hp, Op), lambda b, t: (0, 0)),
                 pl.BlockSpec((1, Op), lambda b, t: (0, 0))]

    kernel = functools.partial(_fused_rnn_kernel, num_layers=L, chunk_len=tc,
                               block_b=block_b, hidden=Hp, compute_dtype=cdt)

    out_p = pl.pallas_call(
        kernel,
        out_shape=jax.ShapeDtypeStruct((Bp, Op), jnp.float32),
        grid=(nb, nt),
        in_specs=in_specs,
        out_specs=pl.BlockSpec((block_b, Op), lambda b, t: (b, 0)),
        scratch_shapes=[pltpu.VMEM((L, block_b, Hp), jnp.float32)],
        compiler_params=pltpu.CompilerParams(
            dimension_semantics=("parallel", "arbitrary"),
            vmem_limit_bytes=48 * 1024 * 1024),
    )(*operands)

    return out_p[:B, :O]


# ----------------------------------------------------------------------------
# Deterministic parameter init (PyTorch nn.RNN-style uniform(-1/sqrt(H), 1/sqrt(H)))
# ----------------------------------------------------------------------------
def init_params(key, input_size, hidden_size, num_layers, output_size):
    params = {"rnn": []}
    bound = 1.0 / jnp.sqrt(hidden_size)
    for l in range(num_layers):
        d_in = input_size if l == 0 else hidden_size
        key, k1, k2, k3, k4 = jax.random.split(key, 5)
        params["rnn"].append({
            "w_ih": jax.random.uniform(k1, (hidden_size, d_in), jnp.float32, -bound, bound),
            "w_hh": jax.random.uniform(k2, (hidden_size, hidden_size), jnp.float32, -bound, bound),
            "b_ih": jax.random.uniform(k3, (hidden_size,), jnp.float32, -bound, bound),
            "b_hh": jax.random.uniform(k4, (hidden_size,), jnp.float32, -bound, bound),
        })
    key, k5, k6 = jax.random.split(key, 3)
    # fc: kaiming-uniform-ish deterministic init; bias filled with 0.01 (as in init_weights)
    fan_in = hidden_size
    fc_bound = jnp.sqrt(6.0 / fan_in)
    params["fc_w"] = jax.random.uniform(k5, (output_size, hidden_size), jnp.float32,
                                        -fc_bound, fc_bound)
    params["fc_b"] = jnp.full((output_size,), 0.01, jnp.float32)
    return params


# ----------------------------------------------------------------------------
# Pure-JAX reference (PyTorch semantics, f32) for correctness check
# ----------------------------------------------------------------------------
def rnn_forward_ref(x_btd, params):
    B, T, _ = x_btd.shape
    h_seq = jnp.transpose(x_btd, (1, 0, 2)).astype(jnp.float32)
    for layer in params["rnn"]:
        H = layer["w_hh"].shape[0]
        h = jnp.zeros((B, H), jnp.float32)
        outs = []
        for t in range(T):
            h = jnp.tanh(h_seq[t] @ layer["w_ih"].T + layer["b_ih"]
                         + h @ layer["w_hh"].T + layer["b_hh"])
            outs.append(h)
        h_seq = jnp.stack(outs, axis=0)
    out = h_seq[-1]
    return out @ params["fc_w"].T + params["fc_b"]


if __name__ == "__main__":
    # Small shapes consistent with the module's forward:
    B, T = 4, 8            # batch, sequence length
    input_size = 16
    hidden_size = 32
    num_layers = 2
    output_size = 8

    key = jax.random.PRNGKey(0)
    key, kx = jax.random.split(key)
    x = jax.random.normal(kx, (B, T, input_size), jnp.float32)
    params = init_params(key, input_size, hidden_size, num_layers, output_size)

    ref = rnn_forward_ref(x, params)

    # f32 MXU path: tight check against the pure-JAX (PyTorch-semantics) reference.
    out_f32 = jax.block_until_ready(rnn_forward(x, params, compute_dtype=jnp.float32))
    assert out_f32.shape == (B, output_size)
    assert jnp.allclose(out_f32, ref, atol=1e-4, rtol=1e-4), "f32 kernel mismatch vs reference"

    # Default bf16-operand / f32-accumulate MXU path: identical structure, looser
    # tolerance due to bf16 operand rounding compounding over the recurrence.
    out = jax.block_until_ready(rnn_forward(x, params))
    assert out.shape == (B, output_size)
    rel = float(jnp.linalg.norm(out - ref) / (jnp.linalg.norm(ref) + 1e-12))
    assert rel < 0.2, f"bf16 kernel relative error too large: {rel}"

    print("KERNEL_OK")
</pallas_src>

<mosaic_0001>
module attributes {stable_mosaic.version = 11 : i64} {
  func.func @_fused_rnn_kernel(%arg0: i32, %arg1: i32, %arg2: memref<8x8x128xf32, #tpu.memory_space<vmem>>, %arg3: memref<128x128xf32, #tpu.memory_space<vmem>>, %arg4: memref<128x128xf32, #tpu.memory_space<vmem>>, %arg5: memref<128x128xf32, #tpu.memory_space<vmem>>, %arg6: memref<1x128xf32, #tpu.memory_space<vmem>>, %arg7: memref<128x128xf32, #tpu.memory_space<vmem>>, %arg8: memref<1x128xf32, #tpu.memory_space<vmem>>, %arg9: memref<8x128xf32, #tpu.memory_space<vmem>>, %arg10: memref<2x8x128xf32, #tpu.memory_space<vmem>>) attributes {dimension_semantics = [#tpu.dimension_semantics<parallel>, #tpu.dimension_semantics<arbitrary>], iteration_bounds = array<i64: 1, 1>, scalar_prefetch = 0 : i64, scratch_operands = 1 : i64, tpu.core_type = #tpu.core_type<tc>, window_params = [{transform_indices = @transform_0, window_bounds = array<i64: 8, 8, 128>}, {pipeline_mode = #tpu.pipeline_mode<synchronous>, transform_indices = @transform_1, window_bounds = array<i64: 128, 128>}, {pipeline_mode = #tpu.pipeline_mode<synchronous>, transform_indices = @transform_2, window_bounds = array<i64: 128, 128>}, {pipeline_mode = #tpu.pipeline_mode<synchronous>, transform_indices = @transform_3, window_bounds = array<i64: 128, 128>}, {pipeline_mode = #tpu.pipeline_mode<synchronous>, transform_indices = @transform_4, window_bounds = array<i64: 1, 128>}, {pipeline_mode = #tpu.pipeline_mode<synchronous>, transform_indices = @transform_5, window_bounds = array<i64: 128, 128>}, {pipeline_mode = #tpu.pipeline_mode<synchronous>, transform_indices = @transform_6, window_bounds = array<i64: 1, 128>}, {transform_indices = @transform_7, window_bounds = array<i64: 8, 128>}]} {
    %c0_i32 = arith.constant 0 : i32
    %0 = arith.cmpi eq, %arg1, %c0_i32 : i32
    %1 = arith.extui %0 : i1 to i32
    %c0_i32_0 = arith.constant 0 : i32
    %2 = arith.cmpi ne, %1, %c0_i32_0 : i32
    scf.if %2 {
      %cst_61 = arith.constant 0.000000e+00 : f32
      %110 = vector.broadcast %cst_61 : f32 to vector<2x8x128xf32>
      %c0_62 = arith.constant 0 : index
      %c0_63 = arith.constant 0 : index
      %c0_64 = arith.constant 0 : index
      %111 = vector.load %arg10[%c0_62, %c0_63, %c0_64] : memref<2x8x128xf32, #tpu.memory_space<vmem>>, vector<2x8x128xf32>
      tpu.vector_store %arg10[%c0_62, %c0_63, %c0_64], %110 {strides = array<i32>} : memref<2x8x128xf32, #tpu.memory_space<vmem>>, vector<2x8x128xf32>,
    } else {
    }
    %c0 = arith.constant 0 : index
    %c0_1 = arith.constant 0 : index
    %3 = vector.load %arg3[%c0, %c0_1] : memref<128x128xf32, #tpu.memory_space<vmem>>, vector<128x128xf32>
    %c0_2 = arith.constant 0 : index
    %c0_3 = arith.constant 0 : index
    %4 = vector.load %arg4[%c0_2, %c0_3] : memref<128x128xf32, #tpu.memory_space<vmem>>, vector<128x128xf32>
    %c0_4 = arith.constant 0 : index
    %c0_5 = arith.constant 0 : index
    %5 = vector.load %arg5[%c0_4, %c0_5] : memref<128x128xf32, #tpu.memory_space<vmem>>, vector<128x128xf32>
    %c0_6 = arith.constant 0 : index
    %c0_7 = arith.constant 0 : index
    %6 = vector.load %arg6[%c0_6, %c0_7] : memref<1x128xf32, #tpu.memory_space<vmem>>, vector<1x128xf32>
    %7 = vector.shape_cast %6 : vector<1x128xf32> to vector<1x128xf32>
    %8 = vector.broadcast %7 : vector<1x128xf32> to vector<8x128xf32>
    %c0_8 = arith.constant 0 : index
    %c0_9 = arith.constant 0 : index
    %c0_10 = arith.constant 0 : index
    %9 = vector.load %arg10[%c0_8, %c0_9, %c0_10] : memref<2x8x128xf32, #tpu.memory_space<vmem>>, vector<1x8x128xf32>
    %10 = vector.shape_cast %9 : vector<1x8x128xf32> to vector<8x128xf32>
    %c1 = arith.constant 1 : index
    %c0_11 = arith.constant 0 : index
    %c0_12 = arith.constant 0 : index
    %11 = vector.load %arg10[%c1, %c0_11, %c0_12] : memref<2x8x128xf32, #tpu.memory_space<vmem>>, vector<1x8x128xf32>
    %12 = vector.shape_cast %11 : vector<1x8x128xf32> to vector<8x128xf32>
    %c0_i32_13 = arith.constant 0 : i32
    %13 = arith.index_cast %c0_i32_13 : i32 to index
    %c0_14 = arith.constant 0 : index
    %c0_15 = arith.constant 0 : index
    %14 = vector.load %arg2[%13, %c0_14, %c0_15] : memref<8x8x128xf32, #tpu.memory_space<vmem>>, vector<1x8x128xf32>
    %15 = vector.shape_cast %14 : vector<1x8x128xf32> to vector<8x128xf32>
    %cst = arith.constant dense<0.000000e+00> : vector<8x128xf32>
    %16 = tpu.matmul %10, %3, %cst {dimension_numbers = #tpu.dot_dimension_numbers<[1], [0], [0], [1], [0, 0, 1, 1], [], []>} : vector<8x128xf32>, vector<128x128xf32>, vector<8x128xf32> -> vector<8x128xf32>
    %17 = arith.addf %15, %16 : vector<8x128xf32>
    %18 = math.tanh %17 : vector<8x128xf32>
    %cst_16 = arith.constant dense<0.000000e+00> : vector<8x128xf32>
    %19 = tpu.matmul %18, %4, %cst_16 {dimension_numbers = #tpu.dot_dimension_numbers<[1], [0], [0], [1], [0, 0, 1, 1], [], []>} : vector<8x128xf32>, vector<128x128xf32>, vector<8x128xf32> -> vector<8x128xf32>
    %cst_17 = arith.constant dense<0.000000e+00> : vector<8x128xf32>
    %20 = tpu.matmul %12, %5, %cst_17 {dimension_numbers = #tpu.dot_dimension_numbers<[1], [0], [0], [1], [0, 0, 1, 1], [], []>} : vector<8x128xf32>, vector<128x128xf32>, vector<8x128xf32> -> vector<8x128xf32>
    %21 = arith.addf %19, %20 : vector<8x128xf32>
    %22 = arith.addf %21, %8 : vector<8x128xf32>
    %23 = math.tanh %22 : vector<8x128xf32>
    %c1_i32 = arith.constant 1 : i32
    %24 = arith.index_cast %c1_i32 : i32 to index
    %c0_18 = arith.constant 0 : index
    %c0_19 = arith.constant 0 : index
    %25 = vector.load %arg2[%24, %c0_18, %c0_19] : memref<8x8x128xf32, #tpu.memory_space<vmem>>, vector<1x8x128xf32>
    %26 = vector.shape_cast %25 : vector<1x8x128xf32> to vector<8x128xf32>
    %cst_20 = arith.constant dense<0.000000e+00> : vector<8x128xf32>
    %27 = tpu.matmul %18, %3, %cst_20 {dimension_numbers = #tpu.dot_dimension_numbers<[1], [0], [0], [1], [0, 0, 1, 1], [], []>} : vector<8x128xf32>, vector<128x128xf32>, vector<8x128xf32> -> vector<8x128xf32>
    %28 = arith.addf %26, %27 : vector<8x128xf32>
    %29 = math.tanh %28 : vector<8x128xf32>
    %cst_21 = arith.constant dense<0.000000e+00> : vector<8x128xf32>
    %30 = tpu.matmul %29, %4, %cst_21 {dimension_numbers = #tpu.dot_dimension_numbers<[1], [0], [0], [1], [0, 0, 1, 1], [], []>} : vector<8x128xf32>, vector<128x128xf32>, vector<8x128xf32> -> vector<8x128xf32>
    %cst_22 = arith.constant dense<0.000000e+00> : vector<8x128xf32>
    %31 = tpu.matmul %23, %5, %cst_22 {dimension_numbers = #tpu.dot_dimension_numbers<[1], [0], [0], [1], [0, 0, 1, 1], [], []>} : vector<8x128xf32>, vector<128x128xf32>, vector<8x128xf32> -> vector<8x128xf32>
    %32 = arith.addf %30, %31 : vector<8x128xf32>
    %33 = arith.addf %32, %8 : vector<8x128xf32>
    %34 = math.tanh %33 : vector<8x128xf32>
    %c2_i32 = arith.constant 2 : i32
    %35 = arith.index_cast %c2_i32 : i32 to index
    %c0_23 = arith.constant 0 : index
    %c0_24 = arith.constant 0 : index
    %36 = vector.load %arg2[%35, %c0_23, %c0_24] : memref<8x8x128xf32, #tpu.memory_space<vmem>>, vector<1x8x128xf32>
    %37 = vector.shape_cast %36 : vector<1x8x128xf32> to vector<8x128xf32>
    %cst_25 = arith.constant dense<0.000000e+00> : vector<8x128xf32>
    %38 = tpu.matmul %29, %3, %cst_25 {dimension_numbers = #tpu.dot_dimension_numbers<[1], [0], [0], [1], [0, 0, 1, 1], [], []>} : vector<8x128xf32>, vector<128x128xf32>, vector<8x128xf32> -> vector<8x128xf32>
    %39 = arith.addf %37, %38 : vector<8x128xf32>
    %40 = math.tanh %39 : vector<8x128xf32>
    %cst_26 = arith.constant dense<0.000000e+00> : vector<8x128xf32>
    %41 = tpu.matmul %40, %4, %cst_26 {dimension_numbers = #tpu.dot_dimension_numbers<[1], [0], [0], [1], [0, 0, 1, 1], [], []>} : vector<8x128xf32>, vector<128x128xf32>, vector<8x128xf32> -> vector<8x128xf32>
    %cst_27 = arith.constant dense<0.000000e+00> : vector<8x128xf32>
    %42 = tpu.matmul %34, %5, %cst_27 {dimension_numbers = #tpu.dot_dimension_numbers<[1], [0], [0], [1], [0, 0, 1, 1], [], []>} : vector<8x128xf32>, vector<128x128xf32>, vector<8x128xf32> -> vector<8x128xf32>
    %43 = arith.addf %41, %42 : vector<8x128xf32>
    %44 = arith.addf %43, %8 : vector<8x128xf32>
    %45 = math.tanh %44 : vector<8x128xf32>
    %c3_i32 = arith.constant 3 : i32
    %46 = arith.index_cast %c3_i32 : i32 to index
    %c0_28 = arith.constant 0 : index
    %c0_29 = arith.constant 0 : index
    %47 = vector.load %arg2[%46, %c0_28, %c0_29] : memref<8x8x128xf32, #tpu.memory_space<vmem>>, vector<1x8x128xf32>
    %48 = vector.shape_cast %47 : vector<1x8x128xf32> to vector<8x128xf32>
    %cst_30 = arith.constant dense<0.000000e+00> : vector<8x128xf32>
    %49 = tpu.matmul %40, %3, %cst_30 {dimension_numbers = #tpu.dot_dimension_numbers<[1], [0], [0], [1], [0, 0, 1, 1], [], []>} : vector<8x128xf32>, vector<128x128xf32>, vector<8x128xf32> -> vector<8x128xf32>
    %50 = arith.addf %48, %49 : vector<8x128xf32>
    %51 = math.tanh %50 : vector<8x128xf32>
    %cst_31 = arith.constant dense<0.000000e+00> : vector<8x128xf32>
    %52 = tpu.matmul %51, %4, %cst_31 {dimension_numbers = #tpu.dot_dimension_numbers<[1], [0], [0], [1], [0, 0, 1, 1], [], []>} : vector<8x128xf32>, vector<128x128xf32>, vector<8x128xf32> -> vector<8x128xf32>
    %cst_32 = arith.constant dense<0.000000e+00> : vector<8x128xf32>
    %53 = tpu.matmul %45, %5, %cst_32 {dimension_numbers = #tpu.dot_dimension_numbers<[1], [0], [0], [1], [0, 0, 1, 1], [], []>} : vector<8x128xf32>, vector<128x128xf32>, vector<8x128xf32> -> vector<8x128xf32>
    %54 = arith.addf %52, %53 : vector<8x128xf32>
    %55 = arith.addf %54, %8 : vector<8x128xf32>
    %56 = math.tanh %55 : vector<8x128xf32>
    %c4_i32 = arith.constant 4 : i32
    %57 = arith.index_cast %c4_i32 : i32 to index
    %c0_33 = arith.constant 0 : index
    %c0_34 = arith.constant 0 : index
    %58 = vector.load %arg2[%57, %c0_33, %c0_34] : memref<8x8x128xf32, #tpu.memory_space<vmem>>, vector<1x8x128xf32>
    %59 = vector.shape_cast %58 : vector<1x8x128xf32> to vector<8x128xf32>
    %cst_35 = arith.constant dense<0.000000e+00> : vector<8x128xf32>
    %60 = tpu.matmul %51, %3, %cst_35 {dimension_numbers = #tpu.dot_dimension_numbers<[1], [0], [0], [1], [0, 0, 1, 1], [], []>} : vector<8x128xf32>, vector<128x128xf32>, vector<8x128xf32> -> vector<8x128xf32>
    %61 = arith.addf %59, %60 : vector<8x128xf32>
    %62 = math.tanh %61 : vector<8x128xf32>
    %cst_36 = arith.constant dense<0.000000e+00> : vector<8x128xf32>
    %63 = tpu.matmul %62, %4, %cst_36 {dimension_numbers = #tpu.dot_dimension_numbers<[1], [0], [0], [1], [0, 0, 1, 1], [], []>} : vector<8x128xf32>, vector<128x128xf32>, vector<8x128xf32> -> vector<8x128xf32>
    %cst_37 = arith.constant dense<0.000000e+00> : vector<8x128xf32>
    %64 = tpu.matmul %56, %5, %cst_37 {dimension_numbers = #tpu.dot_dimension_numbers<[1], [0], [0], [1], [0, 0, 1, 1], [], []>} : vector<8x128xf32>, vector<128x128xf32>, vector<8x128xf32> -> vector<8x128xf32>
    %65 = arith.addf %63, %64 : vector<8x128xf32>
    %66 = arith.addf %65, %8 : vector<8x128xf32>
    %67 = math.tanh %66 : vector<8x128xf32>
    %c5_i32 = arith.constant 5 : i32
    %68 = arith.index_cast %c5_i32 : i32 to index
    %c0_38 = arith.constant 0 : index
    %c0_39 = arith.constant 0 : index
    %69 = vector.load %arg2[%68, %c0_38, %c0_39] : memref<8x8x128xf32, #tpu.memory_space<vmem>>, vector<1x8x128xf32>
    %70 = vector.shape_cast %69 : vector<1x8x128xf32> to vector<8x128xf32>
    %cst_40 = arith.constant dense<0.000000e+00> : vector<8x128xf32>
    %71 = tpu.matmul %62, %3, %cst_40 {dimension_numbers = #tpu.dot_dimension_numbers<[1], [0], [0], [1], [0, 0, 1, 1], [], []>} : vector<8x128xf32>, vector<128x128xf32>, vector<8x128xf32> -> vector<8x128xf32>
    %72 = arith.addf %70, %71 : vector<8x128xf32>
    %73 = math.tanh %72 : vector<8x128xf32>
    %cst_41 = arith.constant dense<0.000000e+00> : vector<8x128xf32>
    %74 = tpu.matmul %73, %4, %cst_41 {dimension_numbers = #tpu.dot_dimension_numbers<[1], [0], [0], [1], [0, 0, 1, 1], [], []>} : vector<8x128xf32>, vector<128x128xf32>, vector<8x128xf32> -> vector<8x128xf32>
    %cst_42 = arith.constant dense<0.000000e+00> : vector<8x128xf32>
    %75 = tpu.matmul %67, %5, %cst_42 {dimension_numbers = #tpu.dot_dimension_numbers<[1], [0], [0], [1], [0, 0, 1, 1], [], []>} : vector<8x128xf32>, vector<128x128xf32>, vector<8x128xf32> -> vector<8x128xf32>
    %76 = arith.addf %74, %75 : vector<8x128xf32>
    %77 = arith.addf %76, %8 : vector<8x128xf32>
    %78 = math.tanh %77 : vector<8x128xf32>
    %c6_i32 = arith.constant 6 : i32
    %79 = arith.index_cast %c6_i32 : i32 to index
    %c0_43 = arith.constant 0 : index
    %c0_44 = arith.constant 0 : index
    %80 = vector.load %arg2[%79, %c0_43, %c0_44] : memref<8x8x128xf32, #tpu.memory_space<vmem>>, vector<1x8x128xf32>
    %81 = vector.shape_cast %80 : vector<1x8x128xf32> to vector<8x128xf32>
    %cst_45 = arith.constant dense<0.000000e+00> : vector<8x128xf32>
    %82 = tpu.matmul %73, %3, %cst_45 {dimension_numbers = #tpu.dot_dimension_numbers<[1], [0], [0], [1], [0, 0, 1, 1], [], []>} : vector<8x128xf32>, vector<128x128xf32>, vector<8x128xf32> -> vector<8x128xf32>
    %83 = arith.addf %81, %82 : vector<8x128xf32>
    %84 = math.tanh %83 : vector<8x128xf32>
    %cst_46 = arith.constant dense<0.000000e+00> : vector<8x128xf32>
    %85 = tpu.matmul %84, %4, %cst_46 {dimension_numbers = #tpu.dot_dimension_numbers<[1], [0], [0], [1], [0, 0, 1, 1], [], []>} : vector<8x128xf32>, vector<128x128xf32>, vector<8x128xf32> -> vector<8x128xf32>
    %cst_47 = arith.constant dense<0.000000e+00> : vector<8x128xf32>
    %86 = tpu.matmul %78, %5, %cst_47 {dimension_numbers = #tpu.dot_dimension_numbers<[1], [0], [0], [1], [0, 0, 1, 1], [], []>} : vector<8x128xf32>, vector<128x128xf32>, vector<8x128xf32> -> vector<8x128xf32>
    %87 = arith.addf %85, %86 : vector<8x128xf32>
    %88 = arith.addf %87, %8 : vector<8x128xf32>
    %89 = math.tanh %88 : vector<8x128xf32>
    %c7_i32 = arith.constant 7 : i32
    %90 = arith.index_cast %c7_i32 : i32 to index
    %c0_48 = arith.constant 0 : index
    %c0_49 = arith.constant 0 : index
    %91 = vector.load %arg2[%90, %c0_48, %c0_49] : memref<8x8x128xf32, #tpu.memory_space<vmem>>, vector<1x8x128xf32>
    %92 = vector.shape_cast %91 : vector<1x8x128xf32> to vector<8x128xf32>
    %cst_50 = arith.constant dense<0.000000e+00> : vector<8x128xf32>
    %93 = tpu.matmul %84, %3, %cst_50 {dimension_numbers = #tpu.dot_dimension_numbers<[1], [0], [0], [1], [0, 0, 1, 1], [], []>} : vector<8x128xf32>, vector<128x128xf32>, vector<8x128xf32> -> vector<8x128xf32>
    %94 = arith.addf %92, %93 : vector<8x128xf32>
    %95 = math.tanh %94 : vector<8x128xf32>
    %cst_51 = arith.constant dense<0.000000e+00> : vector<8x128xf32>
    %96 = tpu.matmul %95, %4, %cst_51 {dimension_numbers = #tpu.dot_dimension_numbers<[1], [0], [0], [1], [0, 0, 1, 1], [], []>} : vector<8x128xf32>, vector<128x128xf32>, vector<8x128xf32> -> vector<8x128xf32>
    %cst_52 = arith.constant dense<0.000000e+00> : vector<8x128xf32>
    %97 = tpu.matmul %89, %5, %cst_52 {dimension_numbers = #tpu.dot_dimension_numbers<[1], [0], [0], [1], [0, 0, 1, 1], [], []>} : vector<8x128xf32>, vector<128x128xf32>, vector<8x128xf32> -> vector<8x128xf32>
    %98 = arith.addf %96, %97 : vector<8x128xf32>
    %99 = arith.addf %98, %8 : vector<8x128xf32>
    %100 = math.tanh %99 : vector<8x128xf32>
    %c8_i32 = arith.constant 8 : i32
    %c0_53 = arith.constant 0 : index
    %c0_54 = arith.constant 0 : index
    %c0_55 = arith.constant 0 : index
    %101 = vector.load %arg10[%c0_53, %c0_54, %c0_55] : memref<2x8x128xf32, #tpu.memory_space<vmem>>, vector<1x8x128xf32>
    %102 = vector.shape_cast %101 : vector<1x8x128xf32> to vector<8x128xf32>
    %103 = vector.shape_cast %95 : vector<8x128xf32> to vector<1x8x128xf32>
    tpu.vector_store %arg10[%c0_53, %c0_54, %c0_55], %103 {strides = array<i32>} : memref<2x8x128xf32, #tpu.memory_space<vmem>>, vector<1x8x128xf32>,
    %c1_56 = arith.constant 1 : index
    %c0_57 = arith.constant 0 : index
    %c0_58 = arith.constant 0 : index
    %104 = vector.load %arg10[%c1_56, %c0_57, %c0_58] : memref<2x8x128xf32, #tpu.memory_space<vmem>>, vector<1x8x128xf32>
    %105 = vector.shape_cast %104 : vector<1x8x128xf32> to vector<8x128xf32>
    %106 = vector.shape_cast %100 : vector<8x128xf32> to vector<1x8x128xf32>
    tpu.vector_store %arg10[%c1_56, %c0_57, %c0_58], %106 {strides = array<i32>} : memref<2x8x128xf32, #tpu.memory_space<vmem>>, vector<1x8x128xf32>,
    %c0_i32_59 = arith.constant 0 : i32
    %107 = arith.cmpi eq, %arg1, %c0_i32_59 : i32
    %108 = arith.extui %107 : i1 to i32
    %c0_i32_60 = arith.constant 0 : i32
    %109 = arith.cmpi ne, %108, %c0_i32_60 : i32
    scf.if %109 {
      %c0_61 = arith.constant 0 : index
      %c0_62 = arith.constant 0 : index
      %110 = vector.load %arg7[%c0_61, %c0_62] : memref<128x128xf32, #tpu.memory_space<vmem>>, vector<128x128xf32>
      %cst_63 = arith.constant dense<0.000000e+00> : vector<8x128xf32>
      %111 = tpu.matmul %100, %110, %cst_63 {dimension_numbers = #tpu.dot_dimension_numbers<[1], [0], [0], [1], [0, 0, 1, 1], [], []>} : vector<8x128xf32>, vector<128x128xf32>, vector<8x128xf32> -> vector<8x128xf32>
      %c0_64 = arith.constant 0 : index
      %c0_65 = arith.constant 0 : index
      %112 = vector.load %arg8[%c0_64, %c0_65] : memref<1x128xf32, #tpu.memory_space<vmem>>, vector<1x128xf32>
      %113 = vector.broadcast %112 : vector<1x128xf32> to vector<8x128xf32>
      %114 = arith.addf %111, %113 : vector<8x128xf32>
      %c0_66 = arith.constant 0 : index
      %c0_67 = arith.constant 0 : index
      %115 = vector.load %arg9[%c0_66, %c0_67] : memref<8x128xf32, #tpu.memory_space<vmem>>, vector<8x128xf32>
      tpu.vector_store %arg9[%c0_66, %c0_67], %114 {strides = array<i32>} : memref<8x128xf32, #tpu.memory_space<vmem>>, vector<8x128xf32>,
    } else {
    }
    return
  }
  func.func @transform_0(%arg0: i32, %arg1: i32) -> (i32, i32, i32) {
    %c0_i32 = arith.constant 0 : i32
    %c0_i32_0 = arith.constant 0 : i32
    return %arg1, %arg0, %c0_i32 : i32, i32, i32
  }
  func.func @transform_1(%arg0: i32, %arg1: i32) -> (i32, i32) {
    %c0_i32 = arith.constant 0 : i32
    %c0_i32_0 = arith.constant 0 : i32
    %c0_i32_1 = arith.constant 0 : i32
    return %c0_i32, %c0_i32_0 : i32, i32
  }
  func.func @transform_2(%arg0: i32, %arg1: i32) -> (i32, i32) {
    %c0_i32 = arith.constant 0 : i32
    %c0_i32_0 = arith.constant 0 : i32
    %c0_i32_1 = arith.constant 0 : i32
    return %c0_i32, %c0_i32_0 : i32, i32
  }
  func.func @transform_3(%arg0: i32, %arg1: i32) -> (i32, i32) {
    %c0_i32 = arith.constant 0 : i32
    %c0_i32_0 = arith.constant 0 : i32
    %c0_i32_1 = arith.constant 0 : i32
    return %c0_i32, %c0_i32_0 : i32, i32
  }
  func.func @transform_4(%arg0: i32, %arg1: i32) -> (i32, i32) {
    %c0_i32 = arith.constant 0 : i32
    %c0_i32_0 = arith.constant 0 : i32
    %c0_i32_1 = arith.constant 0 : i32
    return %c0_i32, %c0_i32_0 : i32, i32
  }
  func.func @transform_5(%arg0: i32, %arg1: i32) -> (i32, i32) {
    %c0_i32 = arith.constant 0 : i32
    %c0_i32_0 = arith.constant 0 : i32
    %c0_i32_1 = arith.constant 0 : i32
    return %c0_i32, %c0_i32_0 : i32, i32
  }
  func.func @transform_6(%arg0: i32, %arg1: i32) -> (i32, i32) {
    %c0_i32 = arith.constant 0 : i32
    %c0_i32_0 = arith.constant 0 : i32
    %c0_i32_1 = arith.constant 0 : i32
    return %c0_i32, %c0_i32_0 : i32, i32
  }
  func.func @transform_7(%arg0: i32, %arg1: i32) -> (i32, i32) {
    %c0_i32 = arith.constant 0 : i32
    %c0_i32_0 = arith.constant 0 : i32
    return %arg0, %c0_i32 : i32, i32
  }
}

</mosaic_0001>

<llo_original>
// kernel: rnn_forward.1
$region0: #{rnn_forward.1}
  #allocation0 [shape = 'u32[]', space=smem, size = 0x4, offset = 0x4, fixed_abs, tag = 'smem constant byte address 0x4 - core index']
  #allocation1 [shape = 'u32[144,128]{1,0:T(1,128)}', space=vmem, size = 0x12000, scoped, tag = 'internal scratch']
  #allocation2 [shape = 'f32[2,8,128]{2,1,0:T(8,128)}', space=vmem, size = 0x2000, scoped, tag = 'scratch operand']
  %s0 = inlined_call_operand.vmem [shape: f32[8,8,128], index: 0, kind: input, shape index: {}]
  %s1 = inlined_call_operand.vmem [shape: f32[128,128], index: 1, kind: input, shape index: {}]
  %s2 = inlined_call_operand.vmem [shape: f32[128,128], index: 2, kind: input, shape index: {}]
  %s3 = inlined_call_operand.vmem [shape: f32[128,128], index: 3, kind: input, shape index: {}]
  %s4 = inlined_call_operand.vmem [shape: f32[1,128], index: 4, kind: input, shape index: {}]
  %s5 = inlined_call_operand.vmem [shape: f32[128,128], index: 5, kind: input, shape index: {}]
  %s6 = inlined_call_operand.vmem [shape: f32[1,128], index: 6, kind: input, shape index: {}]
  %s7 = inlined_call_operand.vmem [shape: f32[8,128], index: 7, kind: output, shape index: {}]
  %s8 = sld [smem:[#allocation0]]
  $region46: #{rnn_forward.1} parent=0
    _
  %s10 = ssub.s32 1, %s8
  %s11 = scalar_select 0, %s10, %s8
  // Predicated region
  $region2: #{rnn_forward.1} parent=0 // pred_check
    _
  $region3: #{rnn_forward.1} parent=0 // pred_check_branch
    %13 = sbr.rel (0) target = $region5
  $region4: #{rnn_forward.1} parent=0 // pred_region
    _
  $region5: #{rnn_forward.1} parent=0 // pred_fallthru
    _
  // Predicated region
  $region6: #{rnn_forward.1} parent=0 // pred_check
    _
  $region7: #{rnn_forward.1} parent=0 // pred_check_branch
    %15 = sbr.rel (0) target = $region9
  $region8: #{rnn_forward.1} parent=0 // pred_region
    _
  $region9: #{rnn_forward.1} parent=0 // pred_fallthru
    _
  // Predicated region
  $region10: #{rnn_forward.1} parent=0 // pred_check
    _
  $region11: #{rnn_forward.1} parent=0 // pred_check_branch
    %17 = sbr.rel (0) target = $region13
  $region12: #{rnn_forward.1} parent=0 // pred_region
    _
  $region13: #{rnn_forward.1} parent=0 // pred_fallthru
    _
  // Predicated region
  $region14: #{rnn_forward.1} parent=0 // pred_check
    _
  $region15: #{rnn_forward.1} parent=0 // pred_check_branch
    %19 = sbr.rel (0) target = $region17
  $region16: #{rnn_forward.1} parent=0 // pred_region
    _
  $region17: #{rnn_forward.1} parent=0 // pred_fallthru
    _
  // Predicated region
  $region18: #{rnn_forward.1} parent=0 // pred_check
    _
  $region19: #{rnn_forward.1} parent=0 // pred_check_branch
    %21 = sbr.rel (0) target = $region21
  $region20: #{rnn_forward.1} parent=0 // pred_region
    _
  $region21: #{rnn_forward.1} parent=0 // pred_fallthru
    _
  // Predicated region
  $region22: #{rnn_forward.1} parent=0 // pred_check
    _
  $region23: #{rnn_forward.1} parent=0 // pred_check_branch
    %23 = sbr.rel (0) target = $region25
  $region24: #{rnn_forward.1} parent=0 // pred_region
    _
  $region25: #{rnn_forward.1} parent=0 // pred_fallthru
    _
  // Predicated region
  $region26: #{rnn_forward.1} parent=0 // pred_check
    _
  $region27: #{rnn_forward.1} parent=0 // pred_check_branch
    %25 = sbr.rel (0) target = $region29
  $region28: #{rnn_forward.1} parent=0 // pred_region
    _
  $region29: #{rnn_forward.1} parent=0 // pred_fallthru
    _
  %p26 = scmp.eq.s32.totalorder 0, 0
  // Predicated region
  $region30: #{rnn_forward.1} parent=0 // pred_check
    %p27 = pneg %p26
  $region31: #{rnn_forward.1} parent=0 // pred_check_branch
    %29 = sbr.rel (%p27) target = $region33
  $region32: #{rnn_forward.1} parent=0 // pred_region
    %30 = vst [vmem:[#allocation2] sm:$0xff] 0.0
    %31 = vst [vmem:[#allocation2 + $0x8] sm:$0xff] 0.0
  $region33: #{rnn_forward.1} parent=0 // pred_fallthru
    _
  %v32 = vld [vmem:[%s1] sm:$0xff]
  %v33 = vld [vmem:[%s1 + $0x8] sm:$0xff]
  %v34 = vld [vmem:[%s1 + $0x10] sm:$0xff]
  %v35 = vld [vmem:[%s1 + $0x18] sm:$0xff]
  %v36 = vld [vmem:[%s1 + $0x20] sm:$0xff]
  %v37 = vld [vmem:[%s1 + $0x28] sm:$0xff]
  %v38 = vld [vmem:[%s1 + $0x30] sm:$0xff]
  %v39 = vld [vmem:[%s1 + $0x38] sm:$0xff]
  %v40 = vld [vmem:[%s1 + $0x40] sm:$0xff]
  %v41 = vld [vmem:[%s1 + $0x48] sm:$0xff]
  %v42 = vld [vmem:[%s1 + $0x50] sm:$0xff]
  %v43 = vld [vmem:[%s1 + $0x58] sm:$0xff]
  %v44 = vld [vmem:[%s1 + $0x60] sm:$0xff]
  %v45 = vld [vmem:[%s1 + $0x68] sm:$0xff]
  %v46 = vld [vmem:[%s1 + $0x70] sm:$0xff]
  %v47 = vld [vmem:[%s1 + $0x78] sm:$0xff]
  %v48 = vld [vmem:[%s2] sm:$0xff]
  %v49 = vld [vmem:[%s2 + $0x8] sm:$0xff]
  %v50 = vld [vmem:[%s2 + $0x10] sm:$0xff]
  %v51 = vld [vmem:[%s2 + $0x18] sm:$0xff]
  %v52 = vld [vmem:[%s2 + $0x20] sm:$0xff]
  %v53 = vld [vmem:[%s2 + $0x28] sm:$0xff]
  %v54 = vld [vmem:[%s2 + $0x30] sm:$0xff]
  %v55 = vld [vmem:[%s2 + $0x38] sm:$0xff]
  %v56 = vld [vmem:[%s2 + $0x40] sm:$0xff]
  %v57 = vld [vmem:[%s2 + $0x48] sm:$0xff]
  %v58 = vld [vmem:[%s2 + $0x50] sm:$0xff]
  %v59 = vld [vmem:[%s2 + $0x58] sm:$0xff]
  %v60 = vld [vmem:[%s2 + $0x60] sm:$0xff]
  %v61 = vld [vmem:[%s2 + $0x68] sm:$0xff]
  %v62 = vld [vmem:[%s2 + $0x70] sm:$0xff]
  %v63 = vld [vmem:[%s2 + $0x78] sm:$0xff]
  %v64 = vld [vmem:[%s3] sm:$0xff]
  %v65 = vld [vmem:[%s3 + $0x8] sm:$0xff]
  %v66 = vld [vmem:[%s3 + $0x10] sm:$0xff]
  %v67 = vld [vmem:[%s3 + $0x18] sm:$0xff]
  %v68 = vld [vmem:[%s3 + $0x20] sm:$0xff]
  %v69 = vld [vmem:[%s3 + $0x28] sm:$0xff]
  %v70 = vld [vmem:[%s3 + $0x30] sm:$0xff]
  %v71 = vld [vmem:[%s3 + $0x38] sm:$0xff]
  %v72 = vld [vmem:[%s3 + $0x40] sm:$0xff]
  %v73 = vld [vmem:[%s3 + $0x48] sm:$0xff]
  %v74 = vld [vmem:[%s3 + $0x50] sm:$0xff]
  %v75 = vld [vmem:[%s3 + $0x58] sm:$0xff]
  %v76 = vld [vmem:[%s3 + $0x60] sm:$0xff]
  %v77 = vld [vmem:[%s3 + $0x68] sm:$0xff]
  %v78 = vld [vmem:[%s3 + $0x70] sm:$0xff]
  %v79 = vld [vmem:[%s3 + $0x78] sm:$0xff]
  %v80 = vld [vmem:[%s4] sm:$0x1]
  %v82 = vlaneseq
  %v83 = vshrl.u32 %v82, 7
  %v84 = vsub.s32 0, %v83
  %v85 = vrot.slane %v80, %v84
  %v87 = vld [vmem:[#allocation2] sm:$0xff]
  %s88 = scalar_lea.vmem [#allocation2], 8
  %v89 = vld [vmem:[%s88] sm:$0xff]
  %v90 = vld [vmem:[%s0] sm:$0xff]
  %91 = vmatprep.subr.mxu0 0.0
  %92 = vmatpush1.msra.mxu0 %v32
  %93 = vmatprep.subr.mxu0 0.0
  %94 = vmatpush1.msra.mxu0 %v33
  %95 = vmatprep.subr.mxu0 0.0
  %96 = vmatpush1.msra.mxu0 %v34
  %97 = vmatprep.subr.mxu0 0.0
  %98 = vmatpush1.msra.mxu0 %v35
  %99 = vmatprep.subr.mxu0 0.0
  %100 = vmatpush1.msra.mxu0 %v36
  %101 = vmatprep.subr.mxu0 0.0
  %102 = vmatpush1.msra.mxu0 %v37
  %103 = vmatprep.subr.mxu0 0.0
  %104 = vmatpush1.msra.mxu0 %v38
  %105 = vmatprep.subr.mxu0 0.0
  %106 = vmatpush1.msra.mxu0 %v39
  %107 = vmatprep.subr.mxu0 0.0
  %108 = vmatpush1.msra.mxu0 %v40
  %109 = vmatprep.subr.mxu0 0.0
  %110 = vmatpush1.msra.mxu0 %v41
  %111 = vmatprep.subr.mxu0 0.0
  %112 = vmatpush1.msra.mxu0 %v42
  %113 = vmatprep.subr.mxu0 0.0
  %114 = vmatpush1.msra.mxu0 %v43
  %115 = vmatprep.subr.mxu0 0.0
  %116 = vmatpush1.msra.mxu0 %v44
  %117 = vmatprep.subr.mxu0 0.0
  %118 = vmatpush1.msra.mxu0 %v45
  %119 = vmatprep.subr.mxu0 0.0
  %120 = vmatpush1.msra.mxu0 %v46
  %121 = vmatprep.subr.mxu0 0.0
  %122 = vmatpush1.msra.mxu0 %v47
  %123 = vmatprep.subr.mxu0 0.0
  %124 = vmatpush1.msra.mxu0 0.0
  %125 = vmatprep.subr.mxu0 0.0
  %126 = vmatpush1.msra.mxu0 0.0
  %127 = vmatprep.subr.mxu0 0.0
  %128 = vmatpush1.msra.mxu0 0.0
  %129 = vmatprep.subr.mxu0 0.0
  %130 = vmatpush1.msra.mxu0 0.0
  %131 = vmatprep.subr.mxu0 0.0
  %132 = vmatpush1.msra.mxu0 0.0
  %133 = vmatprep.subr.mxu0 0.0
  %134 = vmatpush1.msra.mxu0 0.0
  %135 = vmatprep.subr.mxu0 0.0
  %136 = vmatpush1.msra.mxu0 0.0
  %137 = vmatprep.subr.mxu0 0.0
  %138 = vmatpush1.msra.mxu0 0.0
  %139 = vmatprep.subr.mxu0 0.0
  %140 = vmatpush1.msra.mxu0 0.0
  %141 = vmatprep.subr.mxu0 0.0
  %142 = vmatpush1.msra.mxu0 0.0
  %143 = vmatprep.subr.mxu0 0.0
  %144 = vmatpush1.msra.mxu0 0.0
  %145 = vmatprep.subr.mxu0 0.0
  %146 = vmatpush1.msra.mxu0 0.0
  %147 = vmatprep.subr.mxu0 0.0
  %148 = vmatpush1.msra.mxu0 0.0
  %149 = vmatprep.subr.mxu0 0.0
  %150 = vmatpush1.msra.mxu0 0.0
  %151 = vmatprep.subr.mxu0 0.0
  %152 = vmatpush1.msra.mxu0 0.0
  %153 = vmatprep.subr.mxu0 0.0
  %154 = vmatpush1.msra.mxu0 0.0
  %155 = vmatprep.mubr.f32.mxu0 0.0
  %156 = vmatmul.mubr.f32.gmra.mrb[0].mxu0 %v87
  %v157 = vpop.f32.mrb[0].mxu0
  %v158 = vadd.f32 0.0, %v157
  %v159 = vpop.f32.mrb[0].mxu0
  %160 = vdwg.mxu0
  %v161 = vadd.f32 %v90, %v158
  %v162 = vtanh.pop %v161
  %163 = vmatprep.subr.mxu0 0.0
  %164 = vmatpush1.msra.mxu0 %v64
  %165 = vmatprep.subr.mxu0 0.0
  %166 = vmatpush1.msra.mxu0 %v65
  %167 = vmatprep.subr.mxu0 0.0
  %168 = vmatpush1.msra.mxu0 %v66
  %169 = vmatprep.subr.mxu0 0.0
  %170 = vmatpush1.msra.mxu0 %v67
  %171 = vmatprep.subr.mxu0 0.0
  %172 = vmatpush1.msra.mxu0 %v68
  %173 = vmatprep.subr.mxu0 0.0
  %174 = vmatpush1.msra.mxu0 %v69
  %175 = vmatprep.subr.mxu0 0.0
  %176 = vmatpush1.msra.mxu0 %v70
  %177 = vmatprep.subr.mxu0 0.0
  %178 = vmatpush1.msra.mxu0 %v71
  %179 = vmatprep.subr.mxu0 0.0
  %180 = vmatpush1.msra.mxu0 %v72
  %181 = vmatprep.subr.mxu0 0.0
  %182 = vmatpush1.msra.mxu0 %v73
  %183 = vmatprep.subr.mxu0 0.0
  %184 = vmatpush1.msra.mxu0 %v74
  %185 = vmatprep.subr.mxu0 0.0
  %186 = vmatpush1.msra.mxu0 %v75
  %187 = vmatprep.subr.mxu0 0.0
  %188 = vmatpush1.msra.mxu0 %v76
  %189 = vmatprep.subr.mxu0 0.0
  %190 = vmatpush1.msra.mxu0 %v77
  %191 = vmatprep.subr.mxu0 0.0
  %192 = vmatpush1.msra.mxu0 %v78
  %193 = vmatprep.subr.mxu0 0.0
  %194 = vmatpush1.msra.mxu0 %v79
  %195 = vmatprep.subr.mxu0 0.0
  %196 = vmatpush1.msra.mxu0 0.0
  %197 = vmatprep.subr.mxu0 0.0
  %198 = vmatpush1.msra.mxu0 0.0
  %199 = vmatprep.subr.mxu0 0.0
  %200 = vmatpush1.msra.mxu0 0.0
  %201 = vmatprep.subr.mxu0 0.0
  %202 = vmatpush1.msra.mxu0 0.0
  %203 = vmatprep.subr.mxu0 0.0
  %204 = vmatpush1.msra.mxu0 0.0
  %205 = vmatprep.subr.mxu0 0.0
  %206 = vmatpush1.msra.mxu0 0.0
  %207 = vmatprep.subr.mxu0 0.0
  %208 = vmatpush1.msra.mxu0 0.0
  %209 = vmatprep.subr.mxu0 0.0
  %210 = vmatpush1.msra.mxu0 0.0
  %211 = vmatprep.subr.mxu0 0.0
  %212 = vmatpush1.msra.mxu0 0.0
  %213 = vmatprep.subr.mxu0 0.0
  %214 = vmatpush1.msra.mxu0 0.0
  %215 = vmatprep.subr.mxu0 0.0
  %216 = vmatpush1.msra.mxu0 0.0
  %217 = vmatprep.subr.mxu0 0.0
  %218 = vmatpush1.msra.mxu0 0.0
  %219 = vmatprep.subr.mxu0 0.0
  %220 = vmatpush1.msra.mxu0 0.0
  %221 = vmatprep.subr.mxu0 0.0
  %222 = vmatpush1.msra.mxu0 0.0
  %223 = vmatprep.subr.mxu0 0.0
  %224 = vmatpush1.msra.mxu0 0.0
  %225 = vmatprep.subr.mxu0 0.0
  %226 = vmatpush1.msra.mxu0 0.0
  %227 = vmatprep.mubr.f32.mxu0 0.0
  %228 = vmatmul.mubr.f32.gmra.mrb[0].mxu0 %v89
  %v229 = vpop.f32.mrb[0].mxu0
  %v230 = vadd.f32 0.0, %v229
  %v231 = vpop.f32.mrb[0].mxu0
  %232 = vdwg.mxu0
  %233 = vmatprep.subr.mxu0 0.0
  %234 = vmatpush1.msra.mxu0 %v48
  %235 = vmatprep.subr.mxu0 0.0
  %236 = vmatpush1.msra.mxu0 %v49
  %237 = vmatprep.subr.mxu0 0.0
  %238 = vmatpush1.msra.mxu0 %v50
  %239 = vmatprep.subr.mxu0 0.0
  %240 = vmatpush1.msra.mxu0 %v51
  %241 = vmatprep.subr.mxu0 0.0
  %242 = vmatpush1.msra.mxu0 %v52
  %243 = vmatprep.subr.mxu0 0.0
  %244 = vmatpush1.msra.mxu0 %v53
  %245 = vmatprep.subr.mxu0 0.0
  %246 = vmatpush1.msra.mxu0 %v54
  %247 = vmatprep.subr.mxu0 0.0
  %248 = vmatpush1.msra.mxu0 %v55
  %249 = vmatprep.subr.mxu0 0.0
  %250 = vmatpush1.msra.mxu0 %v56
  %251 = vmatprep.subr.mxu0 0.0
  %252 = vmatpush1.msra.mxu0 %v57
  %253 = vmatprep.subr.mxu0 0.0
  %254 = vmatpush1.msra.mxu0 %v58
  %255 = vmatprep.subr.mxu0 0.0
  %256 = vmatpush1.msra.mxu0 %v59
  %257 = vmatprep.subr.mxu0 0.0
  %258 = vmatpush1.msra.mxu0 %v60
  %259 = vmatprep.subr.mxu0 0.0
  %260 = vmatpush1.msra.mxu0 %v61
  %261 = vmatprep.subr.mxu0 0.0
  %262 = vmatpush1.msra.mxu0 %v62
  %263 = vmatprep.subr.mxu0 0.0
  %264 = vmatpush1.msra.mxu0 %v63
  %265 = vmatprep.subr.mxu0 0.0
  %266 = vmatpush1.msra.mxu0 0.0
  %267 = vmatprep.subr.mxu0 0.0
  %268 = vmatpush1.msra.mxu0 0.0
  %269 = vmatprep.subr.mxu0 0.0
  %270 = vmatpush1.msra.mxu0 0.0
  %271 = vmatprep.subr.mxu0 0.0
  %272 = vmatpush1.msra.mxu0 0.0
  %273 = vmatprep.subr.mxu0 0.0
  %274 = vmatpush1.msra.mxu0 0.0
  %275 = vmatprep.subr.mxu0 0.0
  %276 = vmatpush1.msra.mxu0 0.0
  %277 = vmatprep.subr.mxu0 0.0
  %278 = vmatpush1.msra.mxu0 0.0
  %279 = vmatprep.subr.mxu0 0.0
  %280 = vmatpush1.msra.mxu0 0.0
  %281 = vmatprep.subr.mxu0 0.0
  %282 = vmatpush1.msra.mxu0 0.0
  %283 = vmatprep.subr.mxu0 0.0
  %284 = vmatpush1.msra.mxu0 0.0
  %285 = vmatprep.subr.mxu0 0.0
  %286 = vmatpush1.msra.mxu0 0.0
  %287 = vmatprep.subr.mxu0 0.0
  %288 = vmatpush1.msra.mxu0 0.0
  %289 = vmatprep.subr.mxu0 0.0
  %290 = vmatpush1.msra.mxu0 0.0
  %291 = vmatprep.subr.mxu0 0.0
  %292 = vmatpush1.msra.mxu0 0.0
  %293 = vmatprep.subr.mxu0 0.0
  %294 = vmatpush1.msra.mxu0 0.0
  %295 = vmatprep.subr.mxu0 0.0
  %296 = vmatpush1.msra.mxu0 0.0
  %297 = vmatprep.mubr.f32.mxu0 0.0
  %298 = vmatmul.mubr.f32.gmra.mrb[0].mxu0 %v162
  %v299 = vpop.f32.mrb[0].mxu0
  %v300 = vadd.f32 %v230, %v299
  %v301 = vpop.f32.mrb[0].mxu0
  %302 = vdwg.mxu0
  %v303 = vadd.f32 %v300, %v85
  %v304 = vtanh.pop %v303
  %s305 = scalar_lea.vmem %s0, 8
  %v306 = vld [vmem:[%s305] sm:$0xff]
  %307 = vmatprep.subr.mxu0 0.0
  %308 = vmatpush1.msra.mxu0 %v32
  %309 = vmatprep.subr.mxu0 0.0
  %310 = vmatpush1.msra.mxu0 %v33
  %311 = vmatprep.subr.mxu0 0.0
  %312 = vmatpush1.msra.mxu0 %v34
  %313 = vmatprep.subr.mxu0 0.0
  %314 = vmatpush1.msra.mxu0 %v35
  %315 = vmatprep.subr.mxu0 0.0
  %316 = vmatpush1.msra.mxu0 %v36
  %317 = vmatprep.subr.mxu0 0.0
  %318 = vmatpush1.msra.mxu0 %v37
  %319 = vmatprep.subr.mxu0 0.0
  %320 = vmatpush1.msra.mxu0 %v38
  %321 = vmatprep.subr.mxu0 0.0
  %322 = vmatpush1.msra.mxu0 %v39
  %323 = vmatprep.subr.mxu0 0.0
  %324 = vmatpush1.msra.mxu0 %v40
  %325 = vmatprep.subr.mxu0 0.0
  %326 = vmatpush1.msra.mxu0 %v41
  %327 = vmatprep.subr.mxu0 0.0
  %328 = vmatpush1.msra.mxu0 %v42
  %329 = vmatprep.subr.mxu0 0.0
  %330 = vmatpush1.msra.mxu0 %v43
  %331 = vmatprep.subr.mxu0 0.0
  %332 = vmatpush1.msra.mxu0 %v44
  %333 = vmatprep.subr.mxu0 0.0
  %334 = vmatpush1.msra.mxu0 %v45
  %335 = vmatprep.subr.mxu0 0.0
  %336 = vmatpush1.msra.mxu0 %v46
  %337 = vmatprep.subr.mxu0 0.0
  %338 = vmatpush1.msra.mxu0 %v47
  %339 = vmatprep.subr.mxu0 0.0
  %340 = vmatpush1.msra.mxu0 0.0
  %341 = vmatprep.subr.mxu0 0.0
  %342 = vmatpush1.msra.mxu0 0.0
  %343 = vmatprep.subr.mxu0 0.0
  %344 = vmatpush1.msra.mxu0 0.0
  %345 = vmatprep.subr.mxu0 0.0
  %346 = vmatpush1.msra.mxu0 0.0
  %347 = vmatprep.subr.mxu0 0.0
  %348 = vmatpush1.msra.mxu0 0.0
  %349 = vmatprep.subr.mxu0 0.0
  %350 = vmatpush1.msra.mxu0 0.0
  %351 = vmatprep.subr.mxu0 0.0
  %352 = vmatpush1.msra.mxu0 0.0
  %353 = vmatprep.subr.mxu0 0.0
  %354 = vmatpush1.msra.mxu0 0.0
  %355 = vmatprep.subr.mxu0 0.0
  %356 = vmatpush1.msra.mxu0 0.0
  %357 = vmatprep.subr.mxu0 0.0
  %358 = vmatpush1.msra.mxu0 0.0
  %359 = vmatprep.subr.mxu0 0.0
  %360 = vmatpush1.msra.mxu0 0.0
  %361 = vmatprep.subr.mxu0 0.0
  %362 = vmatpush1.msra.mxu0 0.0
  %363 = vmatprep.subr.mxu0 0.0
  %364 = vmatpush1.msra.mxu0 0.0
  %365 = vmatprep.subr.mxu0 0.0
  %366 = vmatpush1.msra.mxu0 0.0
  %367 = vmatprep.subr.mxu0 0.0
  %368 = vmatpush1.msra.mxu0 0.0
  %369 = vmatprep.subr.mxu0 0.0
  %370 = vmatpush1.msra.mxu0 0.0
  %371 = vmatprep.mubr.f32.mxu0 0.0
  %372 = vmatmul.mubr.f32.gmra.mrb[0].mxu0 %v162
  %v373 = vpop.f32.mrb[0].mxu0
  %v374 = vadd.f32 0.0, %v373
  %v375 = vpop.f32.mrb[0].mxu0
  %376 = vdwg.mxu0
  %v377 = vadd.f32 %v306, %v374
  %v378 = vtanh.pop %v377
  %379 = vmatprep.subr.mxu0 0.0
  %380 = vmatpush1.msra.mxu0 %v64
  %381 = vmatprep.subr.mxu0 0.0
  %382 = vmatpush1.msra.mxu0 %v65
  %383 = vmatprep.subr.mxu0 0.0
  %384 = vmatpush1.msra.mxu0 %v66
  %385 = vmatprep.subr.mxu0 0.0
  %386 = vmatpush1.msra.mxu0 %v67
  %387 = vmatprep.subr.mxu0 0.0
  %388 = vmatpush1.msra.mxu0 %v68
  %389 = vmatprep.subr.mxu0 0.0
  %390 = vmatpush1.msra.mxu0 %v69
  %391 = vmatprep.subr.mxu0 0.0
  %392 = vmatpush1.msra.mxu0 %v70
  %393 = vmatprep.subr.mxu0 0.0
  %394 = vmatpush1.msra.mxu0 %v71
  %395 = vmatprep.subr.mxu0 0.0
  %396 = vmatpush1.msra.mxu0 %v72
  %397 = vmatprep.subr.mxu0 0.0
  %398 = vmatpush1.msra.mxu0 %v73
  %399 = vmatprep.subr.mxu0 0.0
  %400 = vmatpush1.msra.mxu0 %v74
  %401 = vmatprep.subr.mxu0 0.0
  %402 = vmatpush1.msra.mxu0 %v75
  %403 = vmatprep.subr.mxu0 0.0
  %404 = vmatpush1.msra.mxu0 %v76
  %405 = vmatprep.subr.mxu0 0.0
  %406 = vmatpush1.msra.mxu0 %v77
  %407 = vmatprep.subr.mxu0 0.0
  %408 = vmatpush1.msra.mxu0 %v78
  %409 = vmatprep.subr.mxu0 0.0
  %410 = vmatpush1.msra.mxu0 %v79
  %411 = vmatprep.subr.mxu0 0.0
  %412 = vmatpush1.msra.mxu0 0.0
  %413 = vmatprep.subr.mxu0 0.0
  %414 = vmatpush1.msra.mxu0 0.0
  %415 = vmatprep.subr.mxu0 0.0
  %416 = vmatpush1.msra.mxu0 0.0
  %417 = vmatprep.subr.mxu0 0.0
  %418 = vmatpush1.msra.mxu0 0.0
  %419 = vmatprep.subr.mxu0 0.0
  %420 = vmatpush1.msra.mxu0 0.0
  %421 = vmatprep.subr.mxu0 0.0
  %422 = vmatpush1.msra.mxu0 0.0
  %423 = vmatprep.subr.mxu0 0.0
  %424 = vmatpush1.msra.mxu0 0.0
  %425 = vmatprep.subr.mxu0 0.0
  %426 = vmatpush1.msra.mxu0 0.0
  %427 = vmatprep.subr.mxu0 0.0
  %428 = vmatpush1.msra.mxu0 0.0
  %429 = vmatprep.subr.mxu0 0.0
  %430 = vmatpush1.msra.mxu0 0.0
  %431 = vmatprep.subr.mxu0 0.0
  %432 = vmatpush1.msra.mxu0 0.0
  %433 = vmatprep.subr.mxu0 0.0
  %434 = vmatpush1.msra.mxu0 0.0
  %435 = vmatprep.subr.mxu0 0.0
  %436 = vmatpush1.msra.mxu0 0.0
  %437 = vmatprep.subr.mxu0 0.0
  %438 = vmatpush1.msra.mxu0 0.0
  %439 = vmatprep.subr.mxu0 0.0
  %440 = vmatpush1.msra.mxu0 0.0
  %441 = vmatprep.subr.mxu0 0.0
  %442 = vmatpush1.msra.mxu0 0.0
  %443 = vmatprep.mubr.f32.mxu0 0.0
  %444 = vmatmul.mubr.f32.gmra.mrb[0].mxu0 %v304
  %v445 = vpop.f32.mrb[0].mxu0
  %v446 = vadd.f32 0.0, %v445
  %v447 = vpop.f32.mrb[0].mxu0
  %448 = vdwg.mxu0
  %449 = vmatprep.subr.mxu0 0.0
  %450 = vmatpush1.msra.mxu0 %v48
  %451 = vmatprep.subr.mxu0 0.0
  %452 = vmatpush1.msra.mxu0 %v49
  %453 = vmatprep.subr.mxu0 0.0
  %454 = vmatpush1.msra.mxu0 %v50
  %455 = vmatprep.subr.mxu0 0.0
  %456 = vmatpush1.msra.mxu0 %v51
  %457 = vmatprep.subr.mxu0 0.0
  %458 = vmatpush1.msra.mxu0 %v52
  %459 = vmatprep.subr.mxu0 0.0
  %460 = vmatpush1.msra.mxu0 %v53
  %461 = vmatprep.subr.mxu0 0.0
  %462 = vmatpush1.msra.mxu0 %v54
  %463 = vmatprep.subr.mxu0 0.0
  %464 = vmatpush1.msra.mxu0 %v55
  %465 = vmatprep.subr.mxu0 0.0
  %466 = vmatpush1.msra.mxu0 %v56
  %467 = vmatprep.subr.mxu0 0.0
  %468 = vmatpush1.msra.mxu0 %v57
  %469 = vmatprep.subr.mxu0 0.0
  %470 = vmatpush1.msra.mxu0 %v58
  %471 = vmatprep.subr.mxu0 0.0
  %472 = vmatpush1.msra.mxu0 %v59
  %473 = vmatprep.subr.mxu0 0.0
  %474 = vmatpush1.msra.mxu0 %v60
  %475 = vmatprep.subr.mxu0 0.0
  %476 = vmatpush1.msra.mxu0 %v61
  %477 = vmatprep.subr.mxu0 0.0
  %478 = vmatpush1.msra.mxu0 %v62
  %479 = vmatprep.subr.mxu0 0.0
  %480 = vmatpush1.msra.mxu0 %v63
  %481 = vmatprep.subr.mxu0 0.0
  %482 = vmatpush1.msra.mxu0 0.0
  %483 = vmatprep.subr.mxu0 0.0
  %484 = vmatpush1.msra.mxu0 0.0
  %485 = vmatprep.subr.mxu0 0.0
  %486 = vmatpush1.msra.mxu0 0.0
  %487 = vmatprep.subr.mxu0 0.0
  %488 = vmatpush1.msra.mxu0 0.0
  %489 = vmatprep.subr.mxu0 0.0
  %490 = vmatpush1.msra.mxu0 0.0
  %491 = vmatprep.subr.mxu0 0.0
  %492 = vmatpush1.msra.mxu0 0.0
  %493 = vmatprep.subr.mxu0 0.0
  %494 = vmatpush1.msra.mxu0 0.0
  %495 = vmatprep.subr.mxu0 0.0
  %496 = vmatpush1.msra.mxu0 0.0
  %497 = vmatprep.subr.mxu0 0.0
  %498 = vmatpush1.msra.mxu0 0.0
  %499 = vmatprep.subr.mxu0 0.0
  %500 = vmatpush1.msra.mxu0 0.0
  %501 = vmatprep.subr.mxu0 0.0
  %502 = vmatpush1.msra.mxu0 0.0
  %503 = vmatprep.subr.mxu0 0.0
  %504 = vmatpush1.msra.mxu0 0.0
  %505 = vmatprep.subr.mxu0 0.0
  %506 = vmatpush1.msra.mxu0 0.0
  %507 = vmatprep.subr.mxu0 0.0
  %508 = vmatpush1.msra.mxu0 0.0
  %509 = vmatprep.subr.mxu0 0.0
  %510 = vmatpush1.msra.mxu0 0.0
  %511 = vmatprep.subr.mxu0 0.0
  %512 = vmatpush1.msra.mxu0 0.0
  %513 = vmatprep.mubr.f32.mxu0 0.0
  %514 = vmatmul.mubr.f32.gmra.mrb[0].mxu0 %v378
  %v515 = vpop.f32.mrb[0].mxu0
  %v516 = vadd.f32 %v446, %v515
  %v517 = vpop.f32.mrb[0].mxu0
  %518 = vdwg.mxu0
  %v519 = vadd.f32 %v516, %v85
  %v520 = vtanh.pop %v519
  %s521 = scalar_lea.vmem %s0, 16
  %v522 = vld [vmem:[%s521] sm:$0xff]
  %523 = vmatprep.subr.mxu0 0.0
  %524 = vmatpush1.msra.mxu0 %v32
  %525 = vmatprep.subr.mxu0 0.0
  %526 = vmatpush1.msra.mxu0 %v33
  %527 = vmatprep.subr.mxu0 0.0
  %528 = vmatpush1.msra.mxu0 %v34
  %529 = vmatprep.subr.mxu0 0.0
  %530 = vmatpush1.msra.mxu0 %v35
  %531 = vmatprep.subr.mxu0 0.0
  %532 = vmatpush1.msra.mxu0 %v36
  %533 = vmatprep.subr.mxu0 0.0
  %534 = vmatpush1.msra.mxu0 %v37
  %535 = vmatprep.subr.mxu0 0.0
  %536 = vmatpush1.msra.mxu0 %v38
  %537 = vmatprep.subr.mxu0 0.0
  %538 = vmatpush1.msra.mxu0 %v39
  %539 = vmatprep.subr.mxu0 0.0
  %540 = vmatpush1.msra.mxu0 %v40
  %541 = vmatprep.subr.mxu0 0.0
  %542 = vmatpush1.msra.mxu0 %v41
  %543 = vmatprep.subr.mxu0 0.0
  %544 = vmatpush1.msra.mxu0 %v42
  %545 = vmatprep.subr.mxu0 0.0
  %546 = vmatpush1.msra.mxu0 %v43
  %547 = vmatprep.subr.mxu0 0.0
  %548 = vmatpush1.msra.mxu0 %v44
  %549 = vmatprep.subr.mxu0 0.0
  %550 = vmatpush1.msra.mxu0 %v45
  %551 = vmatprep.subr.mxu0 0.0
  %552 = vmatpush1.msra.mxu0 %v46
  %553 = vmatprep.subr.mxu0 0.0
  %554 = vmatpush1.msra.mxu0 %v47
  %555 = vmatprep.subr.mxu0 0.0
  %556 = vmatpush1.msra.mxu0 0.0
  %557 = vmatprep.subr.mxu0 0.0
  %558 = vmatpush1.msra.mxu0 0.0
  %559 = vmatprep.subr.mxu0 0.0
  %560 = vmatpush1.msra.mxu0 0.0
  %561 = vmatprep.subr.mxu0 0.0
  %562 = vmatpush1.msra.mxu0 0.0
  %563 = vmatprep.subr.mxu0 0.0
  %564 = vmatpush1.msra.mxu0 0.0
  %565 = vmatprep.subr.mxu0 0.0
  %566 = vmatpush1.msra.mxu0 0.0
  %567 = vmatprep.subr.mxu0 0.0
  %568 = vmatpush1.msra.mxu0 0.0
  %569 = vmatprep.subr.mxu0 0.0
  %570 = vmatpush1.msra.mxu0 0.0
  %571 = vmatprep.subr.mxu0 0.0
  %572 = vmatpush1.msra.mxu0 0.0
  %573 = vmatprep.subr.mxu0 0.0
  %574 = vmatpush1.msra.mxu0 0.0
  %575 = vmatprep.subr.mxu0 0.0
  %576 = vmatpush1.msra.mxu0 0.0
  %577 = vmatprep.subr.mxu0 0.0
  %578 = vmatpush1.msra.mxu0 0.0
  %579 = vmatprep.subr.mxu0 0.0
  %580 = vmatpush1.msra.mxu0 0.0
  %581 = vmatprep.subr.mxu0 0.0
  %582 = vmatpush1.msra.mxu0 0.0
  %583 = vmatprep.subr.mxu0 0.0
  %584 = vmatpush1.msra.mxu0 0.0
  %585 = vmatprep.subr.mxu0 0.0
  %586 = vmatpush1.msra.mxu0 0.0
  %587 = vmatprep.mubr.f32.mxu0 0.0
  %588 = vmatmul.mubr.f32.gmra.mrb[0].mxu0 %v378
  %v589 = vpop.f32.mrb[0].mxu0
  %v590 = vadd.f32 0.0, %v589
  %v591 = vpop.f32.mrb[0].mxu0
  %592 = vdwg.mxu0
  %v593 = vadd.f32 %v522, %v590
  %v594 = vtanh.pop %v593
  %595 = vmatprep.subr.mxu0 0.0
  %596 = vmatpush1.msra.mxu0 %v64
  %597 = vmatprep.subr.mxu0 0.0
  %598 = vmatpush1.msra.mxu0 %v65
  %599 = vmatprep.subr.mxu0 0.0
  %600 = vmatpush1.msra.mxu0 %v66
  %601 = vmatprep.subr.mxu0 0.0
  %602 = vmatpush1.msra.mxu0 %v67
  %603 = vmatprep.subr.mxu0 0.0
  %604 = vmatpush1.msra.mxu0 %v68
  %605 = vmatprep.subr.mxu0 0.0
  %606 = vmatpush1.msra.mxu0 %v69
  %607 = vmatprep.subr.mxu0 0.0
  %608 = vmatpush1.msra.mxu0 %v70
  %609 = vmatprep.subr.mxu0 0.0
  %610 = vmatpush1.msra.mxu0 %v71
  %611 = vmatprep.subr.mxu0 0.0
  %612 = vmatpush1.msra.mxu0 %v72
  %613 = vmatprep.subr.mxu0 0.0
  %614 = vmatpush1.msra.mxu0 %v73
  %615 = vmatprep.subr.mxu0 0.0
  %616 = vmatpush1.msra.mxu0 %v74
  %617 = vmatprep.subr.mxu0 0.0
  %618 = vmatpush1.msra.mxu0 %v75
  %619 = vmatprep.subr.mxu0 0.0
  %620 = vmatpush1.msra.mxu0 %v76
  %621 = vmatprep.subr.mxu0 0.0
  %622 = vmatpush1.msra.mxu0 %v77
  %623 = vmatprep.subr.mxu0 0.0
  %624 = vmatpush1.msra.mxu0 %v78
  %625 = vmatprep.subr.mxu0 0.0
  %626 = vmatpush1.msra.mxu0 %v79
  %627 = vmatprep.subr.mxu0 0.0
  %628 = vmatpush1.msra.mxu0 0.0
  %629 = vmatprep.subr.mxu0 0.0
  %630 = vmatpush1.msra.mxu0 0.0
  %631 = vmatprep.subr.mxu0 0.0
  %632 = vmatpush1.msra.mxu0 0.0
  %633 = vmatprep.subr.mxu0 0.0
  %634 = vmatpush1.msra.mxu0 0.0
  %635 = vmatprep.subr.mxu0 0.0
  %636 = vmatpush1.msra.mxu0 0.0
  %637 = vmatprep.subr.mxu0 0.0
  %638 = vmatpush1.msra.mxu0 0.0
  %639 = vmatprep.subr.mxu0 0.0
  %640 = vmatpush1.msra.mxu0 0.0
  %641 = vmatprep.subr.mxu0 0.0
  %642 = vmatpush1.msra.mxu0 0.0
  %643 = vmatprep.subr.mxu0 0.0
  %644 = vmatpush1.msra.mxu0 0.0
  %645 = vmatprep.subr.mxu0 0.0
  %646 = vmatpush1.msra.mxu0 0.0
  %647 = vmatprep.subr.mxu0 0.0
  %648 = vmatpush1.msra.mxu0 0.0
  %649 = vmatprep.subr.mxu0 0.0
  %650 = vmatpush1.msra.mxu0 0.0
  %651 = vmatprep.subr.mxu0 0.0
  %652 = vmatpush1.msra.mxu0 0.0
  %653 = vmatprep.subr.mxu0 0.0
  %654 = vmatpush1.msra.mxu0 0.0
  %655 = vmatprep.subr.mxu0 0.0
  %656 = vmatpush1.msra.mxu0 0.0
  %657 = vmatprep.subr.mxu0 0.0
  %658 = vmatpush1.msra.mxu0 0.0
  %659 = vmatprep.mubr.f32.mxu0 0.0
  %660 = vmatmul.mubr.f32.gmra.mrb[0].mxu0 %v520
  %v661 = vpop.f32.mrb[0].mxu0
  %v662 = vadd.f32 0.0, %v661
  %v663 = vpop.f32.mrb[0].mxu0
  %664 = vdwg.mxu0
  %665 = vmatprep.subr.mxu0 0.0
  %666 = vmatpush1.msra.mxu0 %v48
  %667 = vmatprep.subr.mxu0 0.0
  %668 = vmatpush1.msra.mxu0 %v49
  %669 = vmatprep.subr.mxu0 0.0
  %670 = vmatpush1.msra.mxu0 %v50
  %671 = vmatprep.subr.mxu0 0.0
  %672 = vmatpush1.msra.mxu0 %v51
  %673 = vmatprep.subr.mxu0 0.0
  %674 = vmatpush1.msra.mxu0 %v52
  %675 = vmatprep.subr.mxu0 0.0
  %676 = vmatpush1.msra.mxu0 %v53
  %677 = vmatprep.subr.mxu0 0.0
  %678 = vmatpush1.msra.mxu0 %v54
  %679 = vmatprep.subr.mxu0 0.0
  %680 = vmatpush1.msra.mxu0 %v55
  %681 = vmatprep.subr.mxu0 0.0
  %682 = vmatpush1.msra.mxu0 %v56
  %683 = vmatprep.subr.mxu0 0.0
  %684 = vmatpush1.msra.mxu0 %v57
  %685 = vmatprep.subr.mxu0 0.0
  %686 = vmatpush1.msra.mxu0 %v58
  %687 = vmatprep.subr.mxu0 0.0
  %688 = vmatpush1.msra.mxu0 %v59
  %689 = vmatprep.subr.mxu0 0.0
  %690 = vmatpush1.msra.mxu0 %v60
  %691 = vmatprep.subr.mxu0 0.0
  %692 = vmatpush1.msra.mxu0 %v61
  %693 = vmatprep.subr.mxu0 0.0
  %694 = vmatpush1.msra.mxu0 %v62
  %695 = vmatprep.subr.mxu0 0.0
  %696 = vmatpush1.msra.mxu0 %v63
  %697 = vmatprep.subr.mxu0 0.0
  %698 = vmatpush1.msra.mxu0 0.0
  %699 = vmatprep.subr.mxu0 0.0
  %700 = vmatpush1.msra.mxu0 0.0
  %701 = vmatprep.subr.mxu0 0.0
  %702 = vmatpush1.msra.mxu0 0.0
  %703 = vmatprep.subr.mxu0 0.0
  %704 = vmatpush1.msra.mxu0 0.0
  %705 = vmatprep.subr.mxu0 0.0
  %706 = vmatpush1.msra.mxu0 0.0
  %707 = vmatprep.subr.mxu0 0.0
  %708 = vmatpush1.msra.mxu0 0.0
  %709 = vmatprep.subr.mxu0 0.0
  %710 = vmatpush1.msra.mxu0 0.0
  %711 = vmatprep.subr.mxu0 0.0
  %712 = vmatpush1.msra.mxu0 0.0
  %713 = vmatprep.subr.mxu0 0.0
  %714 = vmatpush1.msra.mxu0 0.0
  %715 = vmatprep.subr.mxu0 0.0
  %716 = vmatpush1.msra.mxu0 0.0
  %717 = vmatprep.subr.mxu0 0.0
  %718 = vmatpush1.msra.mxu0 0.0
  %719 = vmatprep.subr.mxu0 0.0
  %720 = vmatpush1.msra.mxu0 0.0
  %721 = vmatprep.subr.mxu0 0.0
  %722 = vmatpush1.msra.mxu0 0.0
  %723 = vmatprep.subr.mxu0 0.0
  %724 = vmatpush1.msra.mxu0 0.0
  %725 = vmatprep.subr.mxu0 0.0
  %726 = vmatpush1.msra.mxu0 0.0
  %727 = vmatprep.subr.mxu0 0.0
  %728 = vmatpush1.msra.mxu0 0.0
  %729 = vmatprep.mubr.f32.mxu0 0.0
  %730 = vmatmul.mubr.f32.gmra.mrb[0].mxu0 %v594
  %v731 = vpop.f32.mrb[0].mxu0
  %v732 = vadd.f32 %v662, %v731
  %v733 = vpop.f32.mrb[0].mxu0
  %734 = vdwg.mxu0
  %v735 = vadd.f32 %v732, %v85
  %v736 = vtanh.pop %v735
  %s737 = scalar_lea.vmem %s0, 24
  %v738 = vld [vmem:[%s737] sm:$0xff]
  %739 = vmatprep.subr.mxu0 0.0
  %740 = vmatpush1.msra.mxu0 %v32
  %741 = vmatprep.subr.mxu0 0.0
  %742 = vmatpush1.msra.mxu0 %v33
  %743 = vmatprep.subr.mxu0 0.0
  %744 = vmatpush1.msra.mxu0 %v34
  %745 = vmatprep.subr.mxu0 0.0
  %746 = vmatpush1.msra.mxu0 %v35
  %747 = vmatprep.subr.mxu0 0.0
  %748 = vmatpush1.msra.mxu0 %v36
  %749 = vmatprep.subr.mxu0 0.0
  %750 = vmatpush1.msra.mxu0 %v37
  %751 = vmatprep.subr.mxu0 0.0
  %752 = vmatpush1.msra.mxu0 %v38
  %753 = vmatprep.subr.mxu0 0.0
  %754 = vmatpush1.msra.mxu0 %v39
  %755 = vmatprep.subr.mxu0 0.0
  %756 = vmatpush1.msra.mxu0 %v40
  %757 = vmatprep.subr.mxu0 0.0
  %758 = vmatpush1.msra.mxu0 %v41
  %759 = vmatprep.subr.mxu0 0.0
  %760 = vmatpush1.msra.mxu0 %v42
  %761 = vmatprep.subr.mxu0 0.0
  %762 = vmatpush1.msra.mxu0 %v43
  %763 = vmatprep.subr.mxu0 0.0
  %764 = vmatpush1.msra.mxu0 %v44
  %765 = vmatprep.subr.mxu0 0.0
  %766 = vmatpush1.msra.mxu0 %v45
  %767 = vmatprep.subr.mxu0 0.0
  %768 = vmatpush1.msra.mxu0 %v46
  %769 = vmatprep.subr.mxu0 0.0
  %770 = vmatpush1.msra.mxu0 %v47
  %771 = vmatprep.subr.mxu0 0.0
  %772 = vmatpush1.msra.mxu0 0.0
  %773 = vmatprep.subr.mxu0 0.0
  %774 = vmatpush1.msra.mxu0 0.0
  %775 = vmatprep.subr.mxu0 0.0
  %776 = vmatpush1.msra.mxu0 0.0
  %777 = vmatprep.subr.mxu0 0.0
  %778 = vmatpush1.msra.mxu0 0.0
  %779 = vmatprep.subr.mxu0 0.0
  %780 = vmatpush1.msra.mxu0 0.0
  %781 = vmatprep.subr.mxu0 0.0
  %782 = vmatpush1.msra.mxu0 0.0
  %783 = vmatprep.subr.mxu0 0.0
  %784 = vmatpush1.msra.mxu0 0.0
  %785 = vmatprep.subr.mxu0 0.0
  %786 = vmatpush1.msra.mxu0 0.0
  %787 = vmatprep.subr.mxu0 0.0
  %788 = vmatpush1.msra.mxu0 0.0
  %789 = vmatprep.subr.mxu0 0.0
  %790 = vmatpush1.msra.mxu0 0.0
  %791 = vmatprep.subr.mxu0 0.0
  %792 = vmatpush1.msra.mxu0 0.0
  %793 = vmatprep.subr.mxu0 0.0
  %794 = vmatpush1.msra.mxu0 0.0
  %795 = vmatprep.subr.mxu0 0.0
  %796 = vmatpush1.msra.mxu0 0.0
  %797 = vmatprep.subr.mxu0 0.0
  %798 = vmatpush1.msra.mxu0 0.0
  %799 = vmatprep.subr.mxu0 0.0
  %800 = vmatpush1.msra.mxu0 0.0
  %801 = vmatprep.subr.mxu0 0.0
  %802 = vmatpush1.msra.mxu0 0.0
  %803 = vmatprep.mubr.f32.mxu0 0.0
  %804 = vmatmul.mubr.f32.gmra.mrb[0].mxu0 %v594
  %v805 = vpop.f32.mrb[0].mxu0
  %v806 = vadd.f32 0.0, %v805
  %v807 = vpop.f32.mrb[0].mxu0
  %808 = vdwg.mxu0
  %v809 = vadd.f32 %v738, %v806
  %v810 = vtanh.pop %v809
  %811 = vmatprep.subr.mxu0 0.0
  %812 = vmatpush1.msra.mxu0 %v64
  %813 = vmatprep.subr.mxu0 0.0
  %814 = vmatpush1.msra.mxu0 %v65
  %815 = vmatprep.subr.mxu0 0.0
  %816 = vmatpush1.msra.mxu0 %v66
  %817 = vmatprep.subr.mxu0 0.0
  %818 = vmatpush1.msra.mxu0 %v67
  %819 = vmatprep.subr.mxu0 0.0
  %820 = vmatpush1.msra.mxu0 %v68
  %821 = vmatprep.subr.mxu0 0.0
  %822 = vmatpush1.msra.mxu0 %v69
  %823 = vmatprep.subr.mxu0 0.0
  %824 = vmatpush1.msra.mxu0 %v70
  %825 = vmatprep.subr.mxu0 0.0
  %826 = vmatpush1.msra.mxu0 %v71
  %827 = vmatprep.subr.mxu0 0.0
  %828 = vmatpush1.msra.mxu0 %v72
  %829 = vmatprep.subr.mxu0 0.0
  %830 = vmatpush1.msra.mxu0 %v73
  %831 = vmatprep.subr.mxu0 0.0
  %832 = vmatpush1.msra.mxu0 %v74
  %833 = vmatprep.subr.mxu0 0.0
  %834 = vmatpush1.msra.mxu0 %v75
  %835 = vmatprep.subr.mxu0 0.0
  %836 = vmatpush1.msra.mxu0 %v76
  %837 = vmatprep.subr.mxu0 0.0
  %838 = vmatpush1.msra.mxu0 %v77
  %839 = vmatprep.subr.mxu0 0.0
  %840 = vmatpush1.msra.mxu0 %v78
  %841 = vmatprep.subr.mxu0 0.0
  %842 = vmatpush1.msra.mxu0 %v79
  %843 = vmatprep.subr.mxu0 0.0
  %844 = vmatpush1.msra.mxu0 0.0
  %845 = vmatprep.subr.mxu0 0.0
  %846 = vmatpush1.msra.mxu0 0.0
  %847 = vmatprep.subr.mxu0 0.0
  %848 = vmatpush1.msra.mxu0 0.0
  %849 = vmatprep.subr.mxu0 0.0
  %850 = vmatpush1.msra.mxu0 0.0
  %851 = vmatprep.subr.mxu0 0.0
  %852 = vmatpush1.msra.mxu0 0.0
  %853 = vmatprep.subr.mxu0 0.0
  %854 = vmatpush1.msra.mxu0 0.0
  %855 = vmatprep.subr.mxu0 0.0
  %856 = vmatpush1.msra.mxu0 0.0
  %857 = vmatprep.subr.mxu0 0.0
  %858 = vmatpush1.msra.mxu0 0.0
  %859 = vmatprep.subr.mxu0 0.0
  %860 = vmatpush1.msra.mxu0 0.0
  %861 = vmatprep.subr.mxu0 0.0
  %862 = vmatpush1.msra.mxu0 0.0
  %863 = vmatprep.subr.mxu0 0.0
  %864 = vmatpush1.msra.mxu0 0.0
  %865 = vmatprep.subr.mxu0 0.0
  %866 = vmatpush1.msra.mxu0 0.0
  %867 = vmatprep.subr.mxu0 0.0
  %868 = vmatpush1.msra.mxu0 0.0
  %869 = vmatprep.subr.mxu0 0.0
  %870 = vmatpush1.msra.mxu0 0.0
  %871 = vmatprep.subr.mxu0 0.0
  %872 = vmatpush1.msra.mxu0 0.0
  %873 = vmatprep.subr.mxu0 0.0
  %874 = vmatpush1.msra.mxu0 0.0
  %875 = vmatprep.mubr.f32.mxu0 0.0
  %876 = vmatmul.mubr.f32.gmra.mrb[0].mxu0 %v736
  %v877 = vpop.f32.mrb[0].mxu0
  %v878 = vadd.f32 0.0, %v877
  %v879 = vpop.f32.mrb[0].mxu0
  %880 = vdwg.mxu0
  %881 = vmatprep.subr.mxu0 0.0
  %882 = vmatpush1.msra.mxu0 %v48
  %883 = vmatprep.subr.mxu0 0.0
  %884 = vmatpush1.msra.mxu0 %v49
  %885 = vmatprep.subr.mxu0 0.0
  %886 = vmatpush1.msra.mxu0 %v50
  %887 = vmatprep.subr.mxu0 0.0
  %888 = vmatpush1.msra.mxu0 %v51
  %889 = vmatprep.subr.mxu0 0.0
  %890 = vmatpush1.msra.mxu0 %v52
  %891 = vmatprep.subr.mxu0 0.0
  %892 = vmatpush1.msra.mxu0 %v53
  %893 = vmatprep.subr.mxu0 0.0
  %894 = vmatpush1.msra.mxu0 %v54
  %895 = vmatprep.subr.mxu0 0.0
  %896 = vmatpush1.msra.mxu0 %v55
  %897 = vmatprep.subr.mxu0 0.0
  %898 = vmatpush1.msra.mxu0 %v56
  %899 = vmatprep.subr.mxu0 0.0
  %900 = vmatpush1.msra.mxu0 %v57
  %901 = vmatprep.subr.mxu0 0.0
  %902 = vmatpush1.msra.mxu0 %v58
  %903 = vmatprep.subr.mxu0 0.0
  %904 = vmatpush1.msra.mxu0 %v59
  %905 = vmatprep.subr.mxu0 0.0
  %906 = vmatpush1.msra.mxu0 %v60
  %907 = vmatprep.subr.mxu0 0.0
  %908 = vmatpush1.msra.mxu0 %v61
  %909 = vmatprep.subr.mxu0 0.0
  %910 = vmatpush1.msra.mxu0 %v62
  %911 = vmatprep.subr.mxu0 0.0
  %912 = vmatpush1.msra.mxu0 %v63
  %913 = vmatprep.subr.mxu0 0.0
  %914 = vmatpush1.msra.mxu0 0.0
  %915 = vmatprep.subr.mxu0 0.0
  %916 = vmatpush1.msra.mxu0 0.0
  %917 = vmatprep.subr.mxu0 0.0
  %918 = vmatpush1.msra.mxu0 0.0
  %919 = vmatprep.subr.mxu0 0.0
  %920 = vmatpush1.msra.mxu0 0.0
  %921 = vmatprep.subr.mxu0 0.0
  %922 = vmatpush1.msra.mxu0 0.0
  %923 = vmatprep.subr.mxu0 0.0
  %924 = vmatpush1.msra.mxu0 0.0
  %925 = vmatprep.subr.mxu0 0.0
  %926 = vmatpush1.msra.mxu0 0.0
  %927 = vmatprep.subr.mxu0 0.0
  %928 = vmatpush1.msra.mxu0 0.0
  %929 = vmatprep.subr.mxu0 0.0
  %930 = vmatpush1.msra.mxu0 0.0
  %931 = vmatprep.subr.mxu0 0.0
  %932 = vmatpush1.msra.mxu0 0.0
  %933 = vmatprep.subr.mxu0 0.0
  %934 = vmatpush1.msra.mxu0 0.0
  %935 = vmatprep.subr.mxu0 0.0
  %936 = vmatpush1.msra.mxu0 0.0
  %937 = vmatprep.subr.mxu0 0.0
  %938 = vmatpush1.msra.mxu0 0.0
  %939 = vmatprep.subr.mxu0 0.0
  %940 = vmatpush1.msra.mxu0 0.0
  %941 = vmatprep.subr.mxu0 0.0
  %942 = vmatpush1.msra.mxu0 0.0
  %943 = vmatprep.subr.mxu0 0.0
  %944 = vmatpush1.msra.mxu0 0.0
  %945 = vmatprep.mubr.f32.mxu0 0.0
  %946 = vmatmul.mubr.f32.gmra.mrb[0].mxu0 %v810
  %v947 = vpop.f32.mrb[0].mxu0
  %v948 = vadd.f32 %v878, %v947
  %v949 = vpop.f32.mrb[0].mxu0
  %950 = vdwg.mxu0
  %v951 = vadd.f32 %v948, %v85
  %v952 = vtanh.pop %v951
  %s953 = scalar_lea.vmem %s0, 32
  %v954 = vld [vmem:[%s953] sm:$0xff]
  %955 = vmatprep.subr.mxu0 0.0
  %956 = vmatpush1.msra.mxu0 %v32
  %957 = vmatprep.subr.mxu0 0.0
  %958 = vmatpush1.msra.mxu0 %v33
  %959 = vmatprep.subr.mxu0 0.0
  %960 = vmatpush1.msra.mxu0 %v34
  %961 = vmatprep.subr.mxu0 0.0
  %962 = vmatpush1.msra.mxu0 %v35
  %963 = vmatprep.subr.mxu0 0.0
  %964 = vmatpush1.msra.mxu0 %v36
  %965 = vmatprep.subr.mxu0 0.0
  %966 = vmatpush1.msra.mxu0 %v37
  %967 = vmatprep.subr.mxu0 0.0
  %968 = vmatpush1.msra.mxu0 %v38
  %969 = vmatprep.subr.mxu0 0.0
  %970 = vmatpush1.msra.mxu0 %v39
  %971 = vmatprep.subr.mxu0 0.0
  %972 = vmatpush1.msra.mxu0 %v40
  %973 = vmatprep.subr.mxu0 0.0
  %974 = vmatpush1.msra.mxu0 %v41
  %975 = vmatprep.subr.mxu0 0.0
  %976 = vmatpush1.msra.mxu0 %v42
  %977 = vmatprep.subr.mxu0 0.0
  %978 = vmatpush1.msra.mxu0 %v43
  %979 = vmatprep.subr.mxu0 0.0
  %980 = vmatpush1.msra.mxu0 %v44
  %981 = vmatprep.subr.mxu0 0.0
  %982 = vmatpush1.msra.mxu0 %v45
  %983 = vmatprep.subr.mxu0 0.0
  %984 = vmatpush1.msra.mxu0 %v46
  %985 = vmatprep.subr.mxu0 0.0
  %986 = vmatpush1.msra.mxu0 %v47
  %987 = vmatprep.subr.mxu0 0.0
  %988 = vmatpush1.msra.mxu0 0.0
  %989 = vmatprep.subr.mxu0 0.0
  %990 = vmatpush1.msra.mxu0 0.0
  %991 = vmatprep.subr.mxu0 0.0
  %992 = vmatpush1.msra.mxu0 0.0
  %993 = vmatprep.subr.mxu0 0.0
  %994 = vmatpush1.msra.mxu0 0.0
  %995 = vmatprep.subr.mxu0 0.0
  %996 = vmatpush1.msra.mxu0 0.0
  %997 = vmatprep.subr.mxu0 0.0
  %998 = vmatpush1.msra.mxu0 0.0
  %999 = vmatprep.subr.mxu0 0.0
  %1000 = vmatpush1.msra.mxu0 0.0
  %1001 = vmatprep.subr.mxu0 0.0
  %1002 = vmatpush1.msra.mxu0 0.0
  %1003 = vmatprep.subr.mxu0 0.0
  %1004 = vmatpush1.msra.mxu0 0.0
  %1005 = vmatprep.subr.mxu0 0.0
  %1006 = vmatpush1.msra.mxu0 0.0
  %1007 = vmatprep.subr.mxu0 0.0
  %1008 = vmatpush1.msra.mxu0 0.0
  %1009 = vmatprep.subr.mxu0 0.0
  %1010 = vmatpush1.msra.mxu0 0.0
  %1011 = vmatprep.subr.mxu0 0.0
  %1012 = vmatpush1.msra.mxu0 0.0
  %1013 = vmatprep.subr.mxu0 0.0
  %1014 = vmatpush1.msra.mxu0 0.0
  %1015 = vmatprep.subr.mxu0 0.0
  %1016 = vmatpush1.msra.mxu0 0.0
  %1017 = vmatprep.subr.mxu0 0.0
  %1018 = vmatpush1.msra.mxu0 0.0
  %1019 = vmatprep.mubr.f32.mxu0 0.0
  %1020 = vmatmul.mubr.f32.gmra.mrb[0].mxu0 %v810
  %v1021 = vpop.f32.mrb[0].mxu0
  %v1022 = vadd.f32 0.0, %v1021
  %v1023 = vpop.f32.mrb[0].mxu0
  %1024 = vdwg.mxu0
  %v1025 = vadd.f32 %v954, %v1022
  %v1026 = vtanh.pop %v1025
  %1027 = vmatprep.subr.mxu0 0.0
  %1028 = vmatpush1.msra.mxu0 %v64
  %1029 = vmatprep.subr.mxu0 0.0
  %1030 = vmatpush1.msra.mxu0 %v65
  %1031 = vmatprep.subr.mxu0 0.0
  %1032 = vmatpush1.msra.mxu0 %v66
  %1033 = vmatprep.subr.mxu0 0.0
  %1034 = vmatpush1.msra.mxu0 %v67
  %1035 = vmatprep.subr.mxu0 0.0
  %1036 = vmatpush1.msra.mxu0 %v68
  %1037 = vmatprep.subr.mxu0 0.0
  %1038 = vmatpush1.msra.mxu0 %v69
  %1039 = vmatprep.subr.mxu0 0.0
  %1040 = vmatpush1.msra.mxu0 %v70
  %1041 = vmatprep.subr.mxu0 0.0
  %1042 = vmatpush1.msra.mxu0 %v71
  %1043 = vmatprep.subr.mxu0 0.0
  %1044 = vmatpush1.msra.mxu0 %v72
  %1045 = vmatprep.subr.mxu0 0.0
  %1046 = vmatpush1.msra.mxu0 %v73
  %1047 = vmatprep.subr.mxu0 0.0
  %1048 = vmatpush1.msra.mxu0 %v74
  %1049 = vmatprep.subr.mxu0 0.0
  %1050 = vmatpush1.msra.mxu0 %v75
  %1051 = vmatprep.subr.mxu0 0.0
  %1052 = vmatpush1.msra.mxu0 %v76
  %1053 = vmatprep.subr.mxu0 0.0
  %1054 = vmatpush1.msra.mxu0 %v77
  %1055 = vmatprep.subr.mxu0 0.0
  %1056 = vmatpush1.msra.mxu0 %v78
  %1057 = vmatprep.subr.mxu0 0.0
  %1058 = vmatpush1.msra.mxu0 %v79
  %1059 = vmatprep.subr.mxu0 0.0
  %1060 = vmatpush1.msra.mxu0 0.0
  %1061 = vmatprep.subr.mxu0 0.0
  %1062 = vmatpush1.msra.mxu0 0.0
  %1063 = vmatprep.subr.mxu0 0.0
  %1064 = vmatpush1.msra.mxu0 0.0
  %1065 = vmatprep.subr.mxu0 0.0
  %1066 = vmatpush1.msra.mxu0 0.0
  %1067 = vmatprep.subr.mxu0 0.0
  %1068 = vmatpush1.msra.mxu0 0.0
  %1069 = vmatprep.subr.mxu0 0.0
  %1070 = vmatpush1.msra.mxu0 0.0
  %1071 = vmatprep.subr.mxu0 0.0
  %1072 = vmatpush1.msra.mxu0 0.0
  %1073 = vmatprep.subr.mxu0 0.0
  %1074 = vmatpush1.msra.mxu0 0.0
  %1075 = vmatprep.subr.mxu0 0.0
  %1076 = vmatpush1.msra.mxu0 0.0
  %1077 = vmatprep.subr.mxu0 0.0
  %1078 = vmatpush1.msra.mxu0 0.0
  %1079 = vmatprep.subr.mxu0 0.0
  %1080 = vmatpush1.msra.mxu0 0.0
  %1081 = vmatprep.subr.mxu0 0.0
  %1082 = vmatpush1.msra.mxu0 0.0
  %1083 = vmatprep.subr.mxu0 0.0
  %1084 = vmatpush1.msra.mxu0 0.0
  %1085 = vmatprep.subr.mxu0 0.0
  %1086 = vmatpush1.msra.mxu0 0.0
  %1087 = vmatprep.subr.mxu0 0.0
  %1088 = vmatpush1.msra.mxu0 0.0
  %1089 = vmatprep.subr.mxu0 0.0
  %1090 = vmatpush1.msra.mxu0 0.0
  %1091 = vmatprep.mubr.f32.mxu0 0.0
  %1092 = vmatmul.mubr.f32.gmra.mrb[0].mxu0 %v952
  %v1093 = vpop.f32.mrb[0].mxu0
  %v1094 = vadd.f32 0.0, %v1093
  %v1095 = vpop.f32.mrb[0].mxu0
  %1096 = vdwg.mxu0
  %1097 = vmatprep.subr.mxu0 0.0
  %1098 = vmatpush1.msra.mxu0 %v48
  %1099 = vmatprep.subr.mxu0 0.0
  %1100 = vmatpush1.msra.mxu0 %v49
  %1101 = vmatprep.subr.mxu0 0.0
  %1102 = vmatpush1.msra.mxu0 %v50
  %1103 = vmatprep.subr.mxu0 0.0
  %1104 = vmatpush1.msra.mxu0 %v51
  %1105 = vmatprep.subr.mxu0 0.0
  %1106 = vmatpush1.msra.mxu0 %v52
  %1107 = vmatprep.subr.mxu0 0.0
  %1108 = vmatpush1.msra.mxu0 %v53
  %1109 = vmatprep.subr.mxu0 0.0
  %1110 = vmatpush1.msra.mxu0 %v54
  %1111 = vmatprep.subr.mxu0 0.0
  %1112 = vmatpush1.msra.mxu0 %v55
  %1113 = vmatprep.subr.mxu0 0.0
  %1114 = vmatpush1.msra.mxu0 %v56
  %1115 = vmatprep.subr.mxu0 0.0
  %1116 = vmatpush1.msra.mxu0 %v57
  %1117 = vmatprep.subr.mxu0 0.0
  %1118 = vmatpush1.msra.mxu0 %v58
  %1119 = vmatprep.subr.mxu0 0.0
  %1120 = vmatpush1.msra.mxu0 %v59
  %1121 = vmatprep.subr.mxu0 0.0
  %1122 = vmatpush1.msra.mxu0 %v60
  %1123 = vmatprep.subr.mxu0 0.0
  %1124 = vmatpush1.msra.mxu0 %v61
  %1125 = vmatprep.subr.mxu0 0.0
  %1126 = vmatpush1.msra.mxu0 %v62
  %1127 = vmatprep.subr.mxu0 0.0
  %1128 = vmatpush1.msra.mxu0 %v63
  %1129 = vmatprep.subr.mxu0 0.0
  %1130 = vmatpush1.msra.mxu0 0.0
  %1131 = vmatprep.subr.mxu0 0.0
  %1132 = vmatpush1.msra.mxu0 0.0
  %1133 = vmatprep.subr.mxu0 0.0
  %1134 = vmatpush1.msra.mxu0 0.0
  %1135 = vmatprep.subr.mxu0 0.0
  %1136 = vmatpush1.msra.mxu0 0.0
  %1137 = vmatprep.subr.mxu0 0.0
  %1138 = vmatpush1.msra.mxu0 0.0
  %1139 = vmatprep.subr.mxu0 0.0
  %1140 = vmatpush1.msra.mxu0 0.0
  %1141 = vmatprep.subr.mxu0 0.0
  %1142 = vmatpush1.msra.mxu0 0.0
  %1143 = vmatprep.subr.mxu0 0.0
  %1144 = vmatpush1.msra.mxu0 0.0
  %1145 = vmatprep.subr.mxu0 0.0
  %1146 = vmatpush1.msra.mxu0 0.0
  %1147 = vmatprep.subr.mxu0 0.0
  %1148 = vmatpush1.msra.mxu0 0.0
  %1149 = vmatprep.subr.mxu0 0.0
  %1150 = vmatpush1.msra.mxu0 0.0
  %1151 = vmatprep.subr.mxu0 0.0
  %1152 = vmatpush1.msra.mxu0 0.0
  %1153 = vmatprep.subr.mxu0 0.0
  %1154 = vmatpush1.msra.mxu0 0.0
  %1155 = vmatprep.subr.mxu0 0.0
  %1156 = vmatpush1.msra.mxu0 0.0
  %1157 = vmatprep.subr.mxu0 0.0
  %1158 = vmatpush1.msra.mxu0 0.0
  %1159 = vmatprep.subr.mxu0 0.0
  %1160 = vmatpush1.msra.mxu0 0.0
  %1161 = vmatprep.mubr.f32.mxu0 0.0
  %1162 = vmatmul.mubr.f32.gmra.mrb[0].mxu0 %v1026
  %v1163 = vpop.f32.mrb[0].mxu0
  %v1164 = vadd.f32 %v1094, %v1163
  %v1165 = vpop.f32.mrb[0].mxu0
  %1166 = vdwg.mxu0
  %v1167 = vadd.f32 %v1164, %v85
  %v1168 = vtanh.pop %v1167
  %s1169 = scalar_lea.vmem %s0, 40
  %v1170 = vld [vmem:[%s1169] sm:$0xff]
  %1171 = vmatprep.subr.mxu0 0.0
  %1172 = vmatpush1.msra.mxu0 %v32
  %1173 = vmatprep.subr.mxu0 0.0
  %1174 = vmatpush1.msra.mxu0 %v33
  %1175 = vmatprep.subr.mxu0 0.0
  %1176 = vmatpush1.msra.mxu0 %v34
  %1177 = vmatprep.subr.mxu0 0.0
  %1178 = vmatpush1.msra.mxu0 %v35
  %1179 = vmatprep.subr.mxu0 0.0
  %1180 = vmatpush1.msra.mxu0 %v36
  %1181 = vmatprep.subr.mxu0 0.0
  %1182 = vmatpush1.msra.mxu0 %v37
  %1183 = vmatprep.subr.mxu0 0.0
  %1184 = vmatpush1.msra.mxu0 %v38
  %1185 = vmatprep.subr.mxu0 0.0
  %1186 = vmatpush1.msra.mxu0 %v39
  %1187 = vmatprep.subr.mxu0 0.0
  %1188 = vmatpush1.msra.mxu0 %v40
  %1189 = vmatprep.subr.mxu0 0.0
  %1190 = vmatpush1.msra.mxu0 %v41
  %1191 = vmatprep.subr.mxu0 0.0
  %1192 = vmatpush1.msra.mxu0 %v42
  %1193 = vmatprep.subr.mxu0 0.0
  %1194 = vmatpush1.msra.mxu0 %v43
  %1195 = vmatprep.subr.mxu0 0.0
  %1196 = vmatpush1.msra.mxu0 %v44
  %1197 = vmatprep.subr.mxu0 0.0
  %1198 = vmatpush1.msra.mxu0 %v45
  %1199 = vmatprep.subr.mxu0 0.0
  %1200 = vmatpush1.msra.mxu0 %v46
  %1201 = vmatprep.subr.mxu0 0.0
  %1202 = vmatpush1.msra.mxu0 %v47
  %1203 = vmatprep.subr.mxu0 0.0
  %1204 = vmatpush1.msra.mxu0 0.0
  %1205 = vmatprep.subr.mxu0 0.0
  %1206 = vmatpush1.msra.mxu0 0.0
  %1207 = vmatprep.subr.mxu0 0.0
  %1208 = vmatpush1.msra.mxu0 0.0
  %1209 = vmatprep.subr.mxu0 0.0
  %1210 = vmatpush1.msra.mxu0 0.0
  %1211 = vmatprep.subr.mxu0 0.0
  %1212 = vmatpush1.msra.mxu0 0.0
  %1213 = vmatprep.subr.mxu0 0.0
  %1214 = vmatpush1.msra.mxu0 0.0
  %1215 = vmatprep.subr.mxu0 0.0
  %1216 = vmatpush1.msra.mxu0 0.0
  %1217 = vmatprep.subr.mxu0 0.0
  %1218 = vmatpush1.msra.mxu0 0.0
  %1219 = vmatprep.subr.mxu0 0.0
  %1220 = vmatpush1.msra.mxu0 0.0
  %1221 = vmatprep.subr.mxu0 0.0
  %1222 = vmatpush1.msra.mxu0 0.0
  %1223 = vmatprep.subr.mxu0 0.0
  %1224 = vmatpush1.msra.mxu0 0.0
  %1225 = vmatprep.subr.mxu0 0.0
  %1226 = vmatpush1.msra.mxu0 0.0
  %1227 = vmatprep.subr.mxu0 0.0
  %1228 = vmatpush1.msra.mxu0 0.0
  %1229 = vmatprep.subr.mxu0 0.0
  %1230 = vmatpush1.msra.mxu0 0.0
  %1231 = vmatprep.subr.mxu0 0.0
  %1232 = vmatpush1.msra.mxu0 0.0
  %1233 = vmatprep.subr.mxu0 0.0
  %1234 = vmatpush1.msra.mxu0 0.0
  %1235 = vmatprep.mubr.f32.mxu0 0.0
  %1236 = vmatmul.mubr.f32.gmra.mrb[0].mxu0 %v1026
  %v1237 = vpop.f32.mrb[0].mxu0
  %v1238 = vadd.f32 0.0, %v1237
  %v1239 = vpop.f32.mrb[0].mxu0
  %1240 = vdwg.mxu0
  %v1241 = vadd.f32 %v1170, %v1238
  %v1242 = vtanh.pop %v1241
  %1243 = vmatprep.subr.mxu0 0.0
  %1244 = vmatpush1.msra.mxu0 %v64
  %1245 = vmatprep.subr.mxu0 0.0
  %1246 = vmatpush1.msra.mxu0 %v65
  %1247 = vmatprep.subr.mxu0 0.0
  %1248 = vmatpush1.msra.mxu0 %v66
  %1249 = vmatprep.subr.mxu0 0.0
  %1250 = vmatpush1.msra.mxu0 %v67
  %1251 = vmatprep.subr.mxu0 0.0
  %1252 = vmatpush1.msra.mxu0 %v68
  %1253 = vmatprep.subr.mxu0 0.0
  %1254 = vmatpush1.msra.mxu0 %v69
  %1255 = vmatprep.subr.mxu0 0.0
  %1256 = vmatpush1.msra.mxu0 %v70
  %1257 = vmatprep.subr.mxu0 0.0
  %1258 = vmatpush1.msra.mxu0 %v71
  %1259 = vmatprep.subr.mxu0 0.0
  %1260 = vmatpush1.msra.mxu0 %v72
  %1261 = vmatprep.subr.mxu0 0.0
  %1262 = vmatpush1.msra.mxu0 %v73
  %1263 = vmatprep.subr.mxu0 0.0
  %1264 = vmatpush1.msra.mxu0 %v74
  %1265 = vmatprep.subr.mxu0 0.0
  %1266 = vmatpush1.msra.mxu0 %v75
  %1267 = vmatprep.subr.mxu0 0.0
  %1268 = vmatpush1.msra.mxu0 %v76
  %1269 = vmatprep.subr.mxu0 0.0
  %1270 = vmatpush1.msra.mxu0 %v77
  %1271 = vmatprep.subr.mxu0 0.0
  %1272 = vmatpush1.msra.mxu0 %v78
  %1273 = vmatprep.subr.mxu0 0.0
  %1274 = vmatpush1.msra.mxu0 %v79
  %1275 = vmatprep.subr.mxu0 0.0
  %1276 = vmatpush1.msra.mxu0 0.0
  %1277 = vmatprep.subr.mxu0 0.0
  %1278 = vmatpush1.msra.mxu0 0.0
  %1279 = vmatprep.subr.mxu0 0.0
  %1280 = vmatpush1.msra.mxu0 0.0
  %1281 = vmatprep.subr.mxu0 0.0
  %1282 = vmatpush1.msra.mxu0 0.0
  %1283 = vmatprep.subr.mxu0 0.0
  %1284 = vmatpush1.msra.mxu0 0.0
  %1285 = vmatprep.subr.mxu0 0.0
  %1286 = vmatpush1.msra.mxu0 0.0
  %1287 = vmatprep.subr.mxu0 0.0
  %1288 = vmatpush1.msra.mxu0 0.0
  %1289 = vmatprep.subr.mxu0 0.0
  %1290 = vmatpush1.msra.mxu0 0.0
  %1291 = vmatprep.subr.mxu0 0.0
  %1292 = vmatpush1.msra.mxu0 0.0
  %1293 = vmatprep.subr.mxu0 0.0
  %1294 = vmatpush1.msra.mxu0 0.0
  %1295 = vmatprep.subr.mxu0 0.0
  %1296 = vmatpush1.msra.mxu0 0.0
  %1297 = vmatprep.subr.mxu0 0.0
  %1298 = vmatpush1.msra.mxu0 0.0
  %1299 = vmatprep.subr.mxu0 0.0
  %1300 = vmatpush1.msra.mxu0 0.0
  %1301 = vmatprep.subr.mxu0 0.0
  %1302 = vmatpush1.msra.mxu0 0.0
  %1303 = vmatprep.subr.mxu0 0.0
  %1304 = vmatpush1.msra.mxu0 0.0
  %1305 = vmatprep.subr.mxu0 0.0
  %1306 = vmatpush1.msra.mxu0 0.0
  %1307 = vmatprep.mubr.f32.mxu0 0.0
  %1308 = vmatmul.mubr.f32.gmra.mrb[0].mxu0 %v1168
  %v1309 = vpop.f32.mrb[0].mxu0
  %v1310 = vadd.f32 0.0, %v1309
  %v1311 = vpop.f32.mrb[0].mxu0
  %1312 = vdwg.mxu0
  %1313 = vmatprep.subr.mxu0 0.0
  %1314 = vmatpush1.msra.mxu0 %v48
  %1315 = vmatprep.subr.mxu0 0.0
  %1316 = vmatpush1.msra.mxu0 %v49
  %1317 = vmatprep.subr.mxu0 0.0
  %1318 = vmatpush1.msra.mxu0 %v50
  %1319 = vmatprep.subr.mxu0 0.0
  %1320 = vmatpush1.msra.mxu0 %v51
  %1321 = vmatprep.subr.mxu0 0.0
  %1322 = vmatpush1.msra.mxu0 %v52
  %1323 = vmatprep.subr.mxu0 0.0
  %1324 = vmatpush1.msra.mxu0 %v53
  %1325 = vmatprep.subr.mxu0 0.0
  %1326 = vmatpush1.msra.mxu0 %v54
  %1327 = vmatprep.subr.mxu0 0.0
  %1328 = vmatpush1.msra.mxu0 %v55
  %1329 = vmatprep.subr.mxu0 0.0
  %1330 = vmatpush1.msra.mxu0 %v56
  %1331 = vmatprep.subr.mxu0 0.0
  %1332 = vmatpush1.msra.mxu0 %v57
  %1333 = vmatprep.subr.mxu0 0.0
  %1334 = vmatpush1.msra.mxu0 %v58
  %1335 = vmatprep.subr.mxu0 0.0
  %1336 = vmatpush1.msra.mxu0 %v59
  %1337 = vmatprep.subr.mxu0 0.0
  %1338 = vmatpush1.msra.mxu0 %v60
  %1339 = vmatprep.subr.mxu0 0.0
  %1340 = vmatpush1.msra.mxu0 %v61
  %1341 = vmatprep.subr.mxu0 0.0
  %1342 = vmatpush1.msra.mxu0 %v62
  %1343 = vmatprep.subr.mxu0 0.0
  %1344 = vmatpush1.msra.mxu0 %v63
  %1345 = vmatprep.subr.mxu0 0.0
  %1346 = vmatpush1.msra.mxu0 0.0
  %1347 = vmatprep.subr.mxu0 0.0
  %1348 = vmatpush1.msra.mxu0 0.0
  %1349 = vmatprep.subr.mxu0 0.0
  %1350 = vmatpush1.msra.mxu0 0.0
  %1351 = vmatprep.subr.mxu0 0.0
  %1352 = vmatpush1.msra.mxu0 0.0
  %1353 = vmatprep.subr.mxu0 0.0
  %1354 = vmatpush1.msra.mxu0 0.0
  %1355 = vmatprep.subr.mxu0 0.0
  %1356 = vmatpush1.msra.mxu0 0.0
  %1357 = vmatprep.subr.mxu0 0.0
  %1358 = vmatpush1.msra.mxu0 0.0
  %1359 = vmatprep.subr.mxu0 0.0
  %1360 = vmatpush1.msra.mxu0 0.0
  %1361 = vmatprep.subr.mxu0 0.0
  %1362 = vmatpush1.msra.mxu0 0.0
  %1363 = vmatprep.subr.mxu0 0.0
  %1364 = vmatpush1.msra.mxu0 0.0
  %1365 = vmatprep.subr.mxu0 0.0
  %1366 = vmatpush1.msra.mxu0 0.0
  %1367 = vmatprep.subr.mxu0 0.0
  %1368 = vmatpush1.msra.mxu0 0.0
  %1369 = vmatprep.subr.mxu0 0.0
  %1370 = vmatpush1.msra.mxu0 0.0
  %1371 = vmatprep.subr.mxu0 0.0
  %1372 = vmatpush1.msra.mxu0 0.0
  %1373 = vmatprep.subr.mxu0 0.0
  %1374 = vmatpush1.msra.mxu0 0.0
  %1375 = vmatprep.subr.mxu0 0.0
  %1376 = vmatpush1.msra.mxu0 0.0
  %1377 = vmatprep.mubr.f32.mxu0 0.0
  %1378 = vmatmul.mubr.f32.gmra.mrb[0].mxu0 %v1242
  %v1379 = vpop.f32.mrb[0].mxu0
  %v1380 = vadd.f32 %v1310, %v1379
  %v1381 = vpop.f32.mrb[0].mxu0
  %1382 = vdwg.mxu0
  %v1383 = vadd.f32 %v1380, %v85
  %v1384 = vtanh.pop %v1383
  %s1385 = scalar_lea.vmem %s0, 48
  %v1386 = vld [vmem:[%s1385] sm:$0xff]
  %1387 = vmatprep.subr.mxu0 0.0
  %1388 = vmatpush1.msra.mxu0 %v32
  %1389 = vmatprep.subr.mxu0 0.0
  %1390 = vmatpush1.msra.mxu0 %v33
  %1391 = vmatprep.subr.mxu0 0.0
  %1392 = vmatpush1.msra.mxu0 %v34
  %1393 = vmatprep.subr.mxu0 0.0
  %1394 = vmatpush1.msra.mxu0 %v35
  %1395 = vmatprep.subr.mxu0 0.0
  %1396 = vmatpush1.msra.mxu0 %v36
  %1397 = vmatprep.subr.mxu0 0.0
  %1398 = vmatpush1.msra.mxu0 %v37
  %1399 = vmatprep.subr.mxu0 0.0
  %1400 = vmatpush1.msra.mxu0 %v38
  %1401 = vmatprep.subr.mxu0 0.0
  %1402 = vmatpush1.msra.mxu0 %v39
  %1403 = vmatprep.subr.mxu0 0.0
  %1404 = vmatpush1.msra.mxu0 %v40
  %1405 = vmatprep.subr.mxu0 0.0
  %1406 = vmatpush1.msra.mxu0 %v41
  %1407 = vmatprep.subr.mxu0 0.0
  %1408 = vmatpush1.msra.mxu0 %v42
  %1409 = vmatprep.subr.mxu0 0.0
  %1410 = vmatpush1.msra.mxu0 %v43
  %1411 = vmatprep.subr.mxu0 0.0
  %1412 = vmatpush1.msra.mxu0 %v44
  %1413 = vmatprep.subr.mxu0 0.0
  %1414 = vmatpush1.msra.mxu0 %v45
  %1415 = vmatprep.subr.mxu0 0.0
  %1416 = vmatpush1.msra.mxu0 %v46
  %1417 = vmatprep.subr.mxu0 0.0
  %1418 = vmatpush1.msra.mxu0 %v47
  %1419 = vmatprep.subr.mxu0 0.0
  %1420 = vmatpush1.msra.mxu0 0.0
  %1421 = vmatprep.subr.mxu0 0.0
  %1422 = vmatpush1.msra.mxu0 0.0
  %1423 = vmatprep.subr.mxu0 0.0
  %1424 = vmatpush1.msra.mxu0 0.0
  %1425 = vmatprep.subr.mxu0 0.0
  %1426 = vmatpush1.msra.mxu0 0.0
  %1427 = vmatprep.subr.mxu0 0.0
  %1428 = vmatpush1.msra.mxu0 0.0
  %1429 = vmatprep.subr.mxu0 0.0
  %1430 = vmatpush1.msra.mxu0 0.0
  %1431 = vmatprep.subr.mxu0 0.0
  %1432 = vmatpush1.msra.mxu0 0.0
  %1433 = vmatprep.subr.mxu0 0.0
  %1434 = vmatpush1.msra.mxu0 0.0
  %1435 = vmatprep.subr.mxu0 0.0
  %1436 = vmatpush1.msra.mxu0 0.0
  %1437 = vmatprep.subr.mxu0 0.0
  %1438 = vmatpush1.msra.mxu0 0.0
  %1439 = vmatprep.subr.mxu0 0.0
  %1440 = vmatpush1.msra.mxu0 0.0
  %1441 = vmatprep.subr.mxu0 0.0
  %1442 = vmatpush1.msra.mxu0 0.0
  %1443 = vmatprep.subr.mxu0 0.0
  %1444 = vmatpush1.msra.mxu0 0.0
  %1445 = vmatprep.subr.mxu0 0.0
  %1446 = vmatpush1.msra.mxu0 0.0
  %1447 = vmatprep.subr.mxu0 0.0
  %1448 = vmatpush1.msra.mxu0 0.0
  %1449 = vmatprep.subr.mxu0 0.0
  %1450 = vmatpush1.msra.mxu0 0.0
  %1451 = vmatprep.mubr.f32.mxu0 0.0
  %1452 = vmatmul.mubr.f32.gmra.mrb[0].mxu0 %v1242
  %v1453 = vpop.f32.mrb[0].mxu0
  %v1454 = vadd.f32 0.0, %v1453
  %v1455 = vpop.f32.mrb[0].mxu0
  %1456 = vdwg.mxu0
  %v1457 = vadd.f32 %v1386, %v1454
  %v1458 = vtanh.pop %v1457
  %1459 = vmatprep.subr.mxu0 0.0
  %1460 = vmatpush1.msra.mxu0 %v64
  %1461 = vmatprep.subr.mxu0 0.0
  %1462 = vmatpush1.msra.mxu0 %v65
  %1463 = vmatprep.subr.mxu0 0.0
  %1464 = vmatpush1.msra.mxu0 %v66
  %1465 = vmatprep.subr.mxu0 0.0
  %1466 = vmatpush1.msra.mxu0 %v67
  %1467 = vmatprep.subr.mxu0 0.0
  %1468 = vmatpush1.msra.mxu0 %v68
  %1469 = vmatprep.subr.mxu0 0.0
  %1470 = vmatpush1.msra.mxu0 %v69
  %1471 = vmatprep.subr.mxu0 0.0
  %1472 = vmatpush1.msra.mxu0 %v70
  %1473 = vmatprep.subr.mxu0 0.0
  %1474 = vmatpush1.msra.mxu0 %v71
  %1475 = vmatprep.subr.mxu0 0.0
  %1476 = vmatpush1.msra.mxu0 %v72
  %1477 = vmatprep.subr.mxu0 0.0
  %1478 = vmatpush1.msra.mxu0 %v73
  %1479 = vmatprep.subr.mxu0 0.0
  %1480 = vmatpush1.msra.mxu0 %v74
  %1481 = vmatprep.subr.mxu0 0.0
  %1482 = vmatpush1.msra.mxu0 %v75
  %1483 = vmatprep.subr.mxu0 0.0
  %1484 = vmatpush1.msra.mxu0 %v76
  %1485 = vmatprep.subr.mxu0 0.0
  %1486 = vmatpush1.msra.mxu0 %v77
  %1487 = vmatprep.subr.mxu0 0.0
  %1488 = vmatpush1.msra.mxu0 %v78
  %1489 = vmatprep.subr.mxu0 0.0
  %1490 = vmatpush1.msra.mxu0 %v79
  %1491 = vmatprep.subr.mxu0 0.0
  %1492 = vmatpush1.msra.mxu0 0.0
  %1493 = vmatprep.subr.mxu0 0.0
  %1494 = vmatpush1.msra.mxu0 0.0
  %1495 = vmatprep.subr.mxu0 0.0
  %1496 = vmatpush1.msra.mxu0 0.0
  %1497 = vmatprep.subr.mxu0 0.0
  %1498 = vmatpush1.msra.mxu0 0.0
  %1499 = vmatprep.subr.mxu0 0.0
  %1500 = vmatpush1.msra.mxu0 0.0
  %1501 = vmatprep.subr.mxu0 0.0
  %1502 = vmatpush1.msra.mxu0 0.0
  %1503 = vmatprep.subr.mxu0 0.0
  %1504 = vmatpush1.msra.mxu0 0.0
  %1505 = vmatprep.subr.mxu0 0.0
  %1506 = vmatpush1.msra.mxu0 0.0
  %1507 = vmatprep.subr.mxu0 0.0
  %1508 = vmatpush1.msra.mxu0 0.0
  %1509 = vmatprep.subr.mxu0 0.0
  %1510 = vmatpush1.msra.mxu0 0.0
  %1511 = vmatprep.subr.mxu0 0.0
  %1512 = vmatpush1.msra.mxu0 0.0
  %1513 = vmatprep.subr.mxu0 0.0
  %1514 = vmatpush1.msra.mxu0 0.0
  %1515 = vmatprep.subr.mxu0 0.0
  %1516 = vmatpush1.msra.mxu0 0.0
  %1517 = vmatprep.subr.mxu0 0.0
  %1518 = vmatpush1.msra.mxu0 0.0
  %1519 = vmatprep.subr.mxu0 0.0
  %1520 = vmatpush1.msra.mxu0 0.0
  %1521 = vmatprep.subr.mxu0 0.0
  %1522 = vmatpush1.msra.mxu0 0.0
  %1523 = vmatprep.mubr.f32.mxu0 0.0
  %1524 = vmatmul.mubr.f32.gmra.mrb[0].mxu0 %v1384
  %v1525 = vpop.f32.mrb[0].mxu0
  %v1526 = vadd.f32 0.0, %v1525
  %v1527 = vpop.f32.mrb[0].mxu0
  %1528 = vdwg.mxu0
  %1529 = vmatprep.subr.mxu0 0.0
  %1530 = vmatpush1.msra.mxu0 %v48
  %1531 = vmatprep.subr.mxu0 0.0
  %1532 = vmatpush1.msra.mxu0 %v49
  %1533 = vmatprep.subr.mxu0 0.0
  %1534 = vmatpush1.msra.mxu0 %v50
  %1535 = vmatprep.subr.mxu0 0.0
  %1536 = vmatpush1.msra.mxu0 %v51
  %1537 = vmatprep.subr.mxu0 0.0
  %1538 = vmatpush1.msra.mxu0 %v52
  %1539 = vmatprep.subr.mxu0 0.0
  %1540 = vmatpush1.msra.mxu0 %v53
  %1541 = vmatprep.subr.mxu0 0.0
  %1542 = vmatpush1.msra.mxu0 %v54
  %1543 = vmatprep.subr.mxu0 0.0
  %1544 = vmatpush1.msra.mxu0 %v55
  %1545 = vmatprep.subr.mxu0 0.0
  %1546 = vmatpush1.msra.mxu0 %v56
  %1547 = vmatprep.subr.mxu0 0.0
  %1548 = vmatpush1.msra.mxu0 %v57
  %1549 = vmatprep.subr.mxu0 0.0
  %1550 = vmatpush1.msra.mxu0 %v58
  %1551 = vmatprep.subr.mxu0 0.0
  %1552 = vmatpush1.msra.mxu0 %v59
  %1553 = vmatprep.subr.mxu0 0.0
  %1554 = vmatpush1.msra.mxu0 %v60
  %1555 = vmatprep.subr.mxu0 0.0
  %1556 = vmatpush1.msra.mxu0 %v61
  %1557 = vmatprep.subr.mxu0 0.0
  %1558 = vmatpush1.msra.mxu0 %v62
  %1559 = vmatprep.subr.mxu0 0.0
  %1560 = vmatpush1.msra.mxu0 %v63
  %1561 = vmatprep.subr.mxu0 0.0
  %1562 = vmatpush1.msra.mxu0 0.0
  %1563 = vmatprep.subr.mxu0 0.0
  %1564 = vmatpush1.msra.mxu0 0.0
  %1565 = vmatprep.subr.mxu0 0.0
  %1566 = vmatpush1.msra.mxu0 0.0
  %1567 = vmatprep.subr.mxu0 0.0
  %1568 = vmatpush1.msra.mxu0 0.0
  %1569 = vmatprep.subr.mxu0 0.0
  %1570 = vmatpush1.msra.mxu0 0.0
  %1571 = vmatprep.subr.mxu0 0.0
  %1572 = vmatpush1.msra.mxu0 0.0
  %1573 = vmatprep.subr.mxu0 0.0
  %1574 = vmatpush1.msra.mxu0 0.0
  %1575 = vmatprep.subr.mxu0 0.0
  %1576 = vmatpush1.msra.mxu0 0.0
  %1577 = vmatprep.subr.mxu0 0.0
  %1578 = vmatpush1.msra.mxu0 0.0
  %1579 = vmatprep.subr.mxu0 0.0
  %1580 = vmatpush1.msra.mxu0 0.0
  %1581 = vmatprep.subr.mxu0 0.0
  %1582 = vmatpush1.msra.mxu0 0.0
  %1583 = vmatprep.subr.mxu0 0.0
  %1584 = vmatpush1.msra.mxu0 0.0
  %1585 = vmatprep.subr.mxu0 0.0
  %1586 = vmatpush1.msra.mxu0 0.0
  %1587 = vmatprep.subr.mxu0 0.0
  %1588 = vmatpush1.msra.mxu0 0.0
  %1589 = vmatprep.subr.mxu0 0.0
  %1590 = vmatpush1.msra.mxu0 0.0
  %1591 = vmatprep.subr.mxu0 0.0
  %1592 = vmatpush1.msra.mxu0 0.0
  %1593 = vmatprep.mubr.f32.mxu0 0.0
  %1594 = vmatmul.mubr.f32.gmra.mrb[0].mxu0 %v1458
  %v1595 = vpop.f32.mrb[0].mxu0
  %v1596 = vadd.f32 %v1526, %v1595
  %v1597 = vpop.f32.mrb[0].mxu0
  %1598 = vdwg.mxu0
  %v1599 = vadd.f32 %v1596, %v85
  %v1600 = vtanh.pop %v1599
  %s1601 = scalar_lea.vmem %s0, 56
  %v1602 = vld [vmem:[%s1601] sm:$0xff]
  %1603 = vmatprep.subr.mxu0 0.0
  %1604 = vmatpush1.msra.mxu0 %v32
  %1605 = vmatprep.subr.mxu0 0.0
  %1606 = vmatpush1.msra.mxu0 %v33
  %1607 = vmatprep.subr.mxu0 0.0
  %1608 = vmatpush1.msra.mxu0 %v34
  %1609 = vmatprep.subr.mxu0 0.0
  %1610 = vmatpush1.msra.mxu0 %v35
  %1611 = vmatprep.subr.mxu0 0.0
  %1612 = vmatpush1.msra.mxu0 %v36
  %1613 = vmatprep.subr.mxu0 0.0
  %1614 = vmatpush1.msra.mxu0 %v37
  %1615 = vmatprep.subr.mxu0 0.0
  %1616 = vmatpush1.msra.mxu0 %v38
  %1617 = vmatprep.subr.mxu0 0.0
  %1618 = vmatpush1.msra.mxu0 %v39
  %1619 = vmatprep.subr.mxu0 0.0
  %1620 = vmatpush1.msra.mxu0 %v40
  %1621 = vmatprep.subr.mxu0 0.0
  %1622 = vmatpush1.msra.mxu0 %v41
  %1623 = vmatprep.subr.mxu0 0.0
  %1624 = vmatpush1.msra.mxu0 %v42
  %1625 = vmatprep.subr.mxu0 0.0
  %1626 = vmatpush1.msra.mxu0 %v43
  %1627 = vmatprep.subr.mxu0 0.0
  %1628 = vmatpush1.msra.mxu0 %v44
  %1629 = vmatprep.subr.mxu0 0.0
  %1630 = vmatpush1.msra.mxu0 %v45
  %1631 = vmatprep.subr.mxu0 0.0
  %1632 = vmatpush1.msra.mxu0 %v46
  %1633 = vmatprep.subr.mxu0 0.0
  %1634 = vmatpush1.msra.mxu0 %v47
  %1635 = vmatprep.subr.mxu0 0.0
  %1636 = vmatpush1.msra.mxu0 0.0
  %1637 = vmatprep.subr.mxu0 0.0
  %1638 = vmatpush1.msra.mxu0 0.0
  %1639 = vmatprep.subr.mxu0 0.0
  %1640 = vmatpush1.msra.mxu0 0.0
  %1641 = vmatprep.subr.mxu0 0.0
  %1642 = vmatpush1.msra.mxu0 0.0
  %1643 = vmatprep.subr.mxu0 0.0
  %1644 = vmatpush1.msra.mxu0 0.0
  %1645 = vmatprep.subr.mxu0 0.0
  %1646 = vmatpush1.msra.mxu0 0.0
  %1647 = vmatprep.subr.mxu0 0.0
  %1648 = vmatpush1.msra.mxu0 0.0
  %1649 = vmatprep.subr.mxu0 0.0
  %1650 = vmatpush1.msra.mxu0 0.0
  %1651 = vmatprep.subr.mxu0 0.0
  %1652 = vmatpush1.msra.mxu0 0.0
  %1653 = vmatprep.subr.mxu0 0.0
  %1654 = vmatpush1.msra.mxu0 0.0
  %1655 = vmatprep.subr.mxu0 0.0
  %1656 = vmatpush1.msra.mxu0 0.0
  %1657 = vmatprep.subr.mxu0 0.0
  %1658 = vmatpush1.msra.mxu0 0.0
  %1659 = vmatprep.subr.mxu0 0.0
  %1660 = vmatpush1.msra.mxu0 0.0
  %1661 = vmatprep.subr.mxu0 0.0
  %1662 = vmatpush1.msra.mxu0 0.0
  %1663 = vmatprep.subr.mxu0 0.0
  %1664 = vmatpush1.msra.mxu0 0.0
  %1665 = vmatprep.subr.mxu0 0.0
  %1666 = vmatpush1.msra.mxu0 0.0
  %1667 = vmatprep.mubr.f32.mxu0 0.0
  %1668 = vmatmul.mubr.f32.gmra.mrb[0].mxu0 %v1458
  %v1669 = vpop.f32.mrb[0].mxu0
  %v1670 = vadd.f32 0.0, %v1669
  %v1671 = vpop.f32.mrb[0].mxu0
  %1672 = vdwg.mxu0
  %v1673 = vadd.f32 %v1602, %v1670
  %v1674 = vtanh.pop %v1673
  %1675 = vmatprep.subr.mxu0 0.0
  %1676 = vmatpush1.msra.mxu0 %v64
  %1677 = vmatprep.subr.mxu0 0.0
  %1678 = vmatpush1.msra.mxu0 %v65
  %1679 = vmatprep.subr.mxu0 0.0
  %1680 = vmatpush1.msra.mxu0 %v66
  %1681 = vmatprep.subr.mxu0 0.0
  %1682 = vmatpush1.msra.mxu0 %v67
  %1683 = vmatprep.subr.mxu0 0.0
  %1684 = vmatpush1.msra.mxu0 %v68
  %1685 = vmatprep.subr.mxu0 0.0
  %1686 = vmatpush1.msra.mxu0 %v69
  %1687 = vmatprep.subr.mxu0 0.0
  %1688 = vmatpush1.msra.mxu0 %v70
  %1689 = vmatprep.subr.mxu0 0.0
  %1690 = vmatpush1.msra.mxu0 %v71
  %1691 = vmatprep.subr.mxu0 0.0
  %1692 = vmatpush1.msra.mxu0 %v72
  %1693 = vmatprep.subr.mxu0 0.0
  %1694 = vmatpush1.msra.mxu0 %v73
  %1695 = vmatprep.subr.mxu0 0.0
  %1696 = vmatpush1.msra.mxu0 %v74
  %1697 = vmatprep.subr.mxu0 0.0
  %1698 = vmatpush1.msra.mxu0 %v75
  %1699 = vmatprep.subr.mxu0 0.0
  %1700 = vmatpush1.msra.mxu0 %v76
  %1701 = vmatprep.subr.mxu0 0.0
  %1702 = vmatpush1.msra.mxu0 %v77
  %1703 = vmatprep.subr.mxu0 0.0
  %1704 = vmatpush1.msra.mxu0 %v78
  %1705 = vmatprep.subr.mxu0 0.0
  %1706 = vmatpush1.msra.mxu0 %v79
  %1707 = vmatprep.subr.mxu0 0.0
  %1708 = vmatpush1.msra.mxu0 0.0
  %1709 = vmatprep.subr.mxu0 0.0
  %1710 = vmatpush1.msra.mxu0 0.0
  %1711 = vmatprep.subr.mxu0 0.0
  %1712 = vmatpush1.msra.mxu0 0.0
  %1713 = vmatprep.subr.mxu0 0.0
  %1714 = vmatpush1.msra.mxu0 0.0
  %1715 = vmatprep.subr.mxu0 0.0
  %1716 = vmatpush1.msra.mxu0 0.0
  %1717 = vmatprep.subr.mxu0 0.0
  %1718 = vmatpush1.msra.mxu0 0.0
  %1719 = vmatprep.subr.mxu0 0.0
  %1720 = vmatpush1.msra.mxu0 0.0
  %1721 = vmatprep.subr.mxu0 0.0
  %1722 = vmatpush1.msra.mxu0 0.0
  %1723 = vmatprep.subr.mxu0 0.0
  %1724 = vmatpush1.msra.mxu0 0.0
  %1725 = vmatprep.subr.mxu0 0.0
  %1726 = vmatpush1.msra.mxu0 0.0
  %1727 = vmatprep.subr.mxu0 0.0
  %1728 = vmatpush1.msra.mxu0 0.0
  %1729 = vmatprep.subr.mxu0 0.0
  %1730 = vmatpush1.msra.mxu0 0.0
  %1731 = vmatprep.subr.mxu0 0.0
  %1732 = vmatpush1.msra.mxu0 0.0
  %1733 = vmatprep.subr.mxu0 0.0
  %1734 = vmatpush1.msra.mxu0 0.0
  %1735 = vmatprep.subr.mxu0 0.0
  %1736 = vmatpush1.msra.mxu0 0.0
  %1737 = vmatprep.subr.mxu0 0.0
  %1738 = vmatpush1.msra.mxu0 0.0
  %1739 = vmatprep.mubr.f32.mxu0 0.0
  %1740 = vmatmul.mubr.f32.gmra.mrb[0].mxu0 %v1600
  %v1741 = vpop.f32.mrb[0].mxu0
  %v1742 = vadd.f32 0.0, %v1741
  %v1743 = vpop.f32.mrb[0].mxu0
  %1744 = vdwg.mxu0
  %1745 = vmatprep.subr.mxu0 0.0
  %1746 = vmatpush1.msra.mxu0 %v48
  %1747 = vmatprep.subr.mxu0 0.0
  %1748 = vmatpush1.msra.mxu0 %v49
  %1749 = vmatprep.subr.mxu0 0.0
  %1750 = vmatpush1.msra.mxu0 %v50
  %1751 = vmatprep.subr.mxu0 0.0
  %1752 = vmatpush1.msra.mxu0 %v51
  %1753 = vmatprep.subr.mxu0 0.0
  %1754 = vmatpush1.msra.mxu0 %v52
  %1755 = vmatprep.subr.mxu0 0.0
  %1756 = vmatpush1.msra.mxu0 %v53
  %1757 = vmatprep.subr.mxu0 0.0
  %1758 = vmatpush1.msra.mxu0 %v54
  %1759 = vmatprep.subr.mxu0 0.0
  %1760 = vmatpush1.msra.mxu0 %v55
  %1761 = vmatprep.subr.mxu0 0.0
  %1762 = vmatpush1.msra.mxu0 %v56
  %1763 = vmatprep.subr.mxu0 0.0
  %1764 = vmatpush1.msra.mxu0 %v57
  %1765 = vmatprep.subr.mxu0 0.0
  %1766 = vmatpush1.msra.mxu0 %v58
  %1767 = vmatprep.subr.mxu0 0.0
  %1768 = vmatpush1.msra.mxu0 %v59
  %1769 = vmatprep.subr.mxu0 0.0
  %1770 = vmatpush1.msra.mxu0 %v60
  %1771 = vmatprep.subr.mxu0 0.0
  %1772 = vmatpush1.msra.mxu0 %v61
  %1773 = vmatprep.subr.mxu0 0.0
  %1774 = vmatpush1.msra.mxu0 %v62
  %1775 = vmatprep.subr.mxu0 0.0
  %1776 = vmatpush1.msra.mxu0 %v63
  %1777 = vmatprep.subr.mxu0 0.0
  %1778 = vmatpush1.msra.mxu0 0.0
  %1779 = vmatprep.subr.mxu0 0.0
  %1780 = vmatpush1.msra.mxu0 0.0
  %1781 = vmatprep.subr.mxu0 0.0
  %1782 = vmatpush1.msra.mxu0 0.0
  %1783 = vmatprep.subr.mxu0 0.0
  %1784 = vmatpush1.msra.mxu0 0.0
  %1785 = vmatprep.subr.mxu0 0.0
  %1786 = vmatpush1.msra.mxu0 0.0
  %1787 = vmatprep.subr.mxu0 0.0
  %1788 = vmatpush1.msra.mxu0 0.0
  %1789 = vmatprep.subr.mxu0 0.0
  %1790 = vmatpush1.msra.mxu0 0.0
  %1791 = vmatprep.subr.mxu0 0.0
  %1792 = vmatpush1.msra.mxu0 0.0
  %1793 = vmatprep.subr.mxu0 0.0
  %1794 = vmatpush1.msra.mxu0 0.0
  %1795 = vmatprep.subr.mxu0 0.0
  %1796 = vmatpush1.msra.mxu0 0.0
  %1797 = vmatprep.subr.mxu0 0.0
  %1798 = vmatpush1.msra.mxu0 0.0
  %1799 = vmatprep.subr.mxu0 0.0
  %1800 = vmatpush1.msra.mxu0 0.0
  %1801 = vmatprep.subr.mxu0 0.0
  %1802 = vmatpush1.msra.mxu0 0.0
  %1803 = vmatprep.subr.mxu0 0.0
  %1804 = vmatpush1.msra.mxu0 0.0
  %1805 = vmatprep.subr.mxu0 0.0
  %1806 = vmatpush1.msra.mxu0 0.0
  %1807 = vmatprep.subr.mxu0 0.0
  %1808 = vmatpush1.msra.mxu0 0.0
  %1809 = vmatprep.mubr.f32.mxu0 0.0
  %1810 = vmatmul.mubr.f32.gmra.mrb[0].mxu0 %v1674
  %v1811 = vpop.f32.mrb[0].mxu0
  %v1812 = vadd.f32 %v1742, %v1811
  %v1813 = vpop.f32.mrb[0].mxu0
  %1814 = vdwg.mxu0
  %v1815 = vadd.f32 %v1812, %v85
  %v1816 = vtanh.pop %v1815
  %1817 = vst [vmem:[#allocation2] sm:$0xff] %v1674
  %1818 = vst [vmem:[%s88] sm:$0xff] %v1816
  // Predicated region
  $region34: #{rnn_forward.1} parent=0 // pred_check
    %p1819 = pneg %p26
  $region35: #{rnn_forward.1} parent=0 // pred_check_branch
    %1821 = sbr.rel (%p1819) target = $region37
  $region36: #{rnn_forward.1} parent=0 // pred_region
    %v1822 = vld [vmem:[%s5] sm:$0xff]
    %v1823 = vld [vmem:[%s5 + $0x8] sm:$0xff]
    %v1824 = vld [vmem:[%s5 + $0x10] sm:$0xff]
    %v1825 = vld [vmem:[%s5 + $0x18] sm:$0xff]
    %v1826 = vld [vmem:[%s5 + $0x20] sm:$0xff]
    %v1827 = vld [vmem:[%s5 + $0x28] sm:$0xff]
    %v1828 = vld [vmem:[%s5 + $0x30] sm:$0xff]
    %v1829 = vld [vmem:[%s5 + $0x38] sm:$0xff]
    %v1830 = vld [vmem:[%s5 + $0x40] sm:$0xff]
    %v1831 = vld [vmem:[%s5 + $0x48] sm:$0xff]
    %v1832 = vld [vmem:[%s5 + $0x50] sm:$0xff]
    %v1833 = vld [vmem:[%s5 + $0x58] sm:$0xff]
    %v1834 = vld [vmem:[%s5 + $0x60] sm:$0xff]
    %v1835 = vld [vmem:[%s5 + $0x68] sm:$0xff]
    %v1836 = vld [vmem:[%s5 + $0x70] sm:$0xff]
    %v1837 = vld [vmem:[%s5 + $0x78] sm:$0xff]
    %v1838 = vld [vmem:[%s6] sm:$0x1]
    %v1840 = vlaneseq
    %v1841 = vshrl.u32 %v1840, 7
    %v1842 = vsub.s32 0, %v1841
    %v1843 = vrot.slane %v1838, %v1842
    %1845 = vmatprep.subr.mxu0 0.0
    %1846 = vmatpush1.msra.mxu0 %v1822
    %1847 = vmatprep.subr.mxu0 0.0
    %1848 = vmatpush1.msra.mxu0 %v1823
    %1849 = vmatprep.subr.mxu0 0.0
    %1850 = vmatpush1.msra.mxu0 %v1824
    %1851 = vmatprep.subr.mxu0 0.0
    %1852 = vmatpush1.msra.mxu0 %v1825
    %1853 = vmatprep.subr.mxu0 0.0
    %1854 = vmatpush1.msra.mxu0 %v1826
    %1855 = vmatprep.subr.mxu0 0.0
    %1856 = vmatpush1.msra.mxu0 %v1827
    %1857 = vmatprep.subr.mxu0 0.0
    %1858 = vmatpush1.msra.mxu0 %v1828
    %1859 = vmatprep.subr.mxu0 0.0
    %1860 = vmatpush1.msra.mxu0 %v1829
    %1861 = vmatprep.subr.mxu0 0.0
    %1862 = vmatpush1.msra.mxu0 %v1830
    %1863 = vmatprep.subr.mxu0 0.0
    %1864 = vmatpush1.msra.mxu0 %v1831
    %1865 = vmatprep.subr.mxu0 0.0
    %1866 = vmatpush1.msra.mxu0 %v1832
    %1867 = vmatprep.subr.mxu0 0.0
    %1868 = vmatpush1.msra.mxu0 %v1833
    %1869 = vmatprep.subr.mxu0 0.0
    %1870 = vmatpush1.msra.mxu0 %v1834
    %1871 = vmatprep.subr.mxu0 0.0
    %1872 = vmatpush1.msra.mxu0 %v1835
    %1873 = vmatprep.subr.mxu0 0.0
    %1874 = vmatpush1.msra.mxu0 %v1836
    %1875 = vmatprep.subr.mxu0 0.0
    %1876 = vmatpush1.msra.mxu0 %v1837
    %1877 = vmatprep.subr.mxu0 0.0
    %1878 = vmatpush1.msra.mxu0 0.0
    %1879 = vmatprep.subr.mxu0 0.0
    %1880 = vmatpush1.msra.mxu0 0.0
    %1881 = vmatprep.subr.mxu0 0.0
    %1882 = vmatpush1.msra.mxu0 0.0
    %1883 = vmatprep.subr.mxu0 0.0
    %1884 = vmatpush1.msra.mxu0 0.0
    %1885 = vmatprep.subr.mxu0 0.0
    %1886 = vmatpush1.msra.mxu0 0.0
    %1887 = vmatprep.subr.mxu0 0.0
    %1888 = vmatpush1.msra.mxu0 0.0
    %1889 = vmatprep.subr.mxu0 0.0
    %1890 = vmatpush1.msra.mxu0 0.0
    %1891 = vmatprep.subr.mxu0 0.0
    %1892 = vmatpush1.msra.mxu0 0.0
    %1893 = vmatprep.subr.mxu0 0.0
    %1894 = vmatpush1.msra.mxu0 0.0
    %1895 = vmatprep.subr.mxu0 0.0
    %1896 = vmatpush1.msra.mxu0 0.0
    %1897 = vmatprep.subr.mxu0 0.0
    %1898 = vmatpush1.msra.mxu0 0.0
    %1899 = vmatprep.subr.mxu0 0.0
    %1900 = vmatpush1.msra.mxu0 0.0
    %1901 = vmatprep.subr.mxu0 0.0
    %1902 = vmatpush1.msra.mxu0 0.0
    %1903 = vmatprep.subr.mxu0 0.0
    %1904 = vmatpush1.msra.mxu0 0.0
    %1905 = vmatprep.subr.mxu0 0.0
    %1906 = vmatpush1.msra.mxu0 0.0
    %1907 = vmatprep.subr.mxu0 0.0
    %1908 = vmatpush1.msra.mxu0 0.0
    %1909 = vmatprep.mubr.f32.mxu0 0.0
    %1910 = vmatmul.mubr.f32.gmra.mrb[0].mxu0 %v1816
    %v1911 = vpop.f32.mrb[0].mxu0
    %v1912 = vadd.f32 %v1843, %v1911
    %v1913 = vpop.f32.mrb[0].mxu0
    %1914 = vdwg.mxu0
    %1915 = vst [vmem:[%s7] sm:$0xff] %v1912
  $region37: #{rnn_forward.1} parent=0 // pred_fallthru
    _
  // Predicated region
  $region38: #{rnn_forward.1} parent=0 // pred_check
    _
  $region39: #{rnn_forward.1} parent=0 // pred_check_branch
    %1917 = sbr.rel (0) target = $region41
  $region40: #{rnn_forward.1} parent=0 // pred_region
    _
  $region41: #{rnn_forward.1} parent=0 // pred_fallthru
    _
  // Predicated region
  $region42: #{rnn_forward.1} parent=0 // pred_check
    _
  $region43: #{rnn_forward.1} parent=0 // pred_check_branch
    %1919 = sbr.rel (0) target = $region45
  $region44: #{rnn_forward.1} parent=0 // pred_region
    _
  $region45: #{rnn_forward.1} parent=0 // pred_fallthru
    _

</llo_original>
